<compile_context>
chip_gen: v6e
topology: v6e:2x2x1
jax: 0.10.0
libtpu: 0.0.40
codegen_flags: <defaults>
</compile_context>

<pallas_src>
import functools

import jax
import jax.numpy as jnp
from jax import lax
from jax.experimental import pallas as pl
from jax.experimental.pallas import tpu as pltpu


def _lstm_classifier_kernel(
    ids_ref,      # (T*B, 1)      i32   time-major flattened token ids
    fused0_ref,   # (V, 4H)       bf16  emb_table @ W_ih[0], gate order i,f,o,g
    w_hh0_ref,    # (H, 4H)       bf16  layer-0 recurrent weights (i,f,o,g)
    w_cat_ref,    # (Lc, 2H, 4H)  bf16  [[W_ih],[W_hh]] for layers >= 1
    b_ref,        # (L, 1, 4H)    f32   b_ih + b_hh, gate order i,f,o,g
    fc_w_ref,     # (H, O)        bf16
    fc_b_ref,     # (1, O)        f32
    out_ref,      # (B, O)        f32
    *,
    n_layers: int,
    batch: int,
    hidden: int,
    seq_len: int,
    vocab: int,
):
    B, H, T, V = batch, hidden, seq_len, vocab
    TB = T * B

    def lstm_step(gates, c):
        # gates: (B, 4H) f32, gate order [i, f, o, g]; all elementwise in f32.
        sig = jax.nn.sigmoid(gates[:, : 3 * H])   # one EUP slab for i, f, o
        g_g = jnp.tanh(gates[:, 3 * H:])          # one EUP slab for g
        i_g = sig[:, 0 * H:1 * H]
        f_g = sig[:, 1 * H:2 * H]
        o_g = sig[:, 2 * H:3 * H]
        c_new = f_g * c + i_g * g_g
        h_new = o_g * jnp.tanh(c_new)
        return h_new, c_new

    # ---- 1. Fused embedding gather + layer-0 input projection + bias. ----
    ids = ids_ref[...]                                       # (TB, 1) i32
    iota_v = lax.broadcasted_iota(jnp.int32, (TB, V), 1)     # (TB, V)
    onehot = (iota_v == ids).astype(jnp.bfloat16)            # exact 0/1
    pre0 = (
        jnp.dot(onehot, fused0_ref[...], preferred_element_type=jnp.float32)
        + b_ref[0]
    )                                                        # (TB, 4H) f32

    # ---- 2. Layer 0 recurrence (pre-gates hoisted, h/c live in vregs). ----
    w_hh0 = w_hh0_ref[...]
    h = jnp.zeros((B, H), jnp.float32)
    c = jnp.zeros((B, H), jnp.float32)
    xs = []                                       # per-step layer outputs
    for t in range(T):                            # static full unroll
        gates = pre0[t * B:(t + 1) * B, :] + jnp.dot(
            h.astype(jnp.bfloat16), w_hh0, preferred_element_type=jnp.float32)
        h, c = lstm_step(gates, c)
        xs.append(h)

    # ---- 3. Layers >= 1: per-step concatenated [x_t | h_{t-1}] matmul. ----
    # TODO(synk): inter-layer dropout not applied (module configured DROPOUT=0.0).
    for layer in range(1, n_layers):
        w_cat = w_cat_ref[layer - 1]              # (2H, 4H) bf16
        bias = b_ref[layer]                       # (1, 4H)  f32
        h = jnp.zeros((B, H), jnp.float32)
        c = jnp.zeros((B, H), jnp.float32)
        new_xs = []
        for t in range(T):
            xh = jnp.concatenate([xs[t], h], axis=1).astype(jnp.bfloat16)
            gates = jnp.dot(xh, w_cat,
                            preferred_element_type=jnp.float32) + bias
            h, c = lstm_step(gates, c)
            new_xs.append(h)
        xs = new_xs

    # ---- 4. Final Linear + exact softmax on the last time step. ----
    logits = (
        jnp.dot(h.astype(jnp.bfloat16), fc_w_ref[...],
                preferred_element_type=jnp.float32)
        + fc_b_ref[...]
    )                                             # (B, O) f32
    m = jnp.max(logits, axis=1, keepdims=True)
    e = jnp.exp(logits - m)
    out_ref[...] = e / jnp.sum(e, axis=1, keepdims=True)


def _permute_gates_ifog(w):
    """Reorder the last (4H) axis from torch order [i,f,g,o] to [i,f,o,g]."""
    i, f, g, o = jnp.split(w, 4, axis=-1)
    return jnp.concatenate([i, f, o, g], axis=-1)


def text_lstm_classifier_forward(token_ids, params, *, n_layers, hidden):
    """token_ids: (B, T) int.  Returns softmax probabilities (B, O)."""
    emb = params["embedding"].astype(jnp.float32)   # (V, E)
    B, T = token_ids.shape
    V, E = emb.shape
    H = hidden
    O = params["fc_b"].shape[-1]
    if n_layers > 1:
        # Stacked-layer weights share one (L, E, 4H) array => layers >= 1
        # consume H-sized inputs.
        assert E == H, "stacked layers require EMB_SIZE == HIDDEN_SIZE"

    # Token ids, time-major flattened to (T*B, 1) int32.
    ids_tm = jnp.transpose(token_ids.astype(jnp.int32)).reshape(T * B, 1)

    # One-time (per model) weight preparation; all transforms are linear so
    # fusing the embedding into W_ih[0] is exact.
    fused0 = _permute_gates_ifog(emb @ params["w_ih"][0]).astype(jnp.bfloat16)
    w_hh0 = _permute_gates_ifog(params["w_hh"][0]).astype(jnp.bfloat16)
    if n_layers > 1:
        w_cat = jnp.concatenate(
            [_permute_gates_ifog(params["w_ih"][1:]),
             _permute_gates_ifog(params["w_hh"][1:])],
            axis=1,
        ).astype(jnp.bfloat16)                           # (L-1, 2H, 4H)
    else:
        w_cat = jnp.zeros((1, 2 * H, 4 * H), jnp.bfloat16)   # unused dummy
    n_cat = w_cat.shape[0]
    bias = _permute_gates_ifog(params["b"]).astype(jnp.float32)   # (L, 1, 4H)
    fc_w = params["fc_w"].astype(jnp.bfloat16)
    fc_b = params["fc_b"].astype(jnp.float32)

    kernel = functools.partial(
        _lstm_classifier_kernel,
        n_layers=n_layers, batch=B, hidden=H, seq_len=T, vocab=V,
    )

    return pl.pallas_call(
        kernel,
        out_shape=jax.ShapeDtypeStruct((B, O), jnp.float32),
        grid_spec=pltpu.PrefetchScalarGridSpec(
            num_scalar_prefetch=0,
            grid=(1,),
            in_specs=[
                pl.BlockSpec((T * B, 1), lambda i: (0, 0)),
                pl.BlockSpec((V, 4 * H), lambda i: (0, 0)),
                pl.BlockSpec((H, 4 * H), lambda i: (0, 0)),
                pl.BlockSpec((n_cat, 2 * H, 4 * H), lambda i: (0, 0, 0)),
                pl.BlockSpec((n_layers, 1, 4 * H), lambda i: (0, 0, 0)),
                pl.BlockSpec((H, O), lambda i: (0, 0)),
                pl.BlockSpec((1, O), lambda i: (0, 0)),
            ],
            out_specs=pl.BlockSpec((B, O), lambda i: (0, 0)),
        ),
        compiler_params=pltpu.CompilerParams(
            dimension_semantics=("arbitrary",)),
    )(ids_tm, fused0, w_hh0, w_cat, bias, fc_w, fc_b)


def _reference_forward(token_ids, params, *, n_layers, hidden):
    """Pure-JAX f32 reference mirroring torch semantics (sanity check)."""
    H = hidden
    emb = params["embedding"][token_ids.astype(jnp.int32)]  # (B, T, E)
    x = emb
    B, T, _ = x.shape
    for layer in range(n_layers):
        w_ih = params["w_ih"][layer]
        w_hh = params["w_hh"][layer]
        b = params["b"][layer]
        h = jnp.zeros((B, H), jnp.float32)
        c = jnp.zeros((B, H), jnp.float32)
        outs = []
        for t in range(T):
            gates = x[:, t, :] @ w_ih + h @ w_hh + b
            i_g = jax.nn.sigmoid(gates[:, 0 * H:1 * H])
            f_g = jax.nn.sigmoid(gates[:, 1 * H:2 * H])
            g_g = jnp.tanh(gates[:, 2 * H:3 * H])
            o_g = jax.nn.sigmoid(gates[:, 3 * H:4 * H])
            c = f_g * c + i_g * g_g
            h = o_g * jnp.tanh(c)
            outs.append(h)
        x = jnp.stack(outs, axis=1)
    logits = x[:, -1, :] @ params["fc_w"] + params["fc_b"]
    return jax.nn.softmax(logits, axis=1)


def make_params(key, vocab, emb, hidden, output, n_layers):
    """Deterministic parameter init (uniform, a la PyTorch defaults).

    Weights are stored pre-transposed ((in_features, 4H) etc.) in torch gate
    order [i, f, g, o]; the wrapper applies the [i, f, o, g] permutation and
    the embedding/W_ih[0] fusion (do the same to real checkpoint weights).
    """
    H = hidden
    keys = jax.random.split(key, 8)
    k = 1.0 / jnp.sqrt(H)
    emb_table = jax.random.normal(keys[0], (vocab, emb), jnp.float32)
    w_ih = jax.random.uniform(keys[1], (n_layers, emb, 4 * H), jnp.float32, -k, k)
    w_hh = jax.random.uniform(keys[2], (n_layers, H, 4 * H), jnp.float32, -k, k)
    b_ih = jax.random.uniform(keys[3], (n_layers, 1, 4 * H), jnp.float32, -k, k)
    b_hh = jax.random.uniform(keys[4], (n_layers, 1, 4 * H), jnp.float32, -k, k)
    fc_w = jax.random.uniform(keys[5], (H, output), jnp.float32, -k, k)
    fc_b = jax.random.uniform(keys[6], (1, output), jnp.float32, -k, k)
    return {
        "embedding": emb_table,
        "w_ih": w_ih,
        "w_hh": w_hh,
        "b": b_ih + b_hh,
        "fc_w": fc_w,
        "fc_b": fc_b,
    }


if __name__ == "__main__":
    VOCAB_SIZE = 64
    EMB_SIZE = 32
    HIDDEN_SIZE = 32
    OUTPUT_SIZE = 8
    N_LAYER = 2
    DROPOUT = 0.0         # inference-equivalent; dropout not applied
    B, T = 2, 8

    key = jax.random.PRNGKey(0)
    pkey, xkey = jax.random.split(key)
    params = make_params(pkey, VOCAB_SIZE, EMB_SIZE, HIDDEN_SIZE,
                         OUTPUT_SIZE, N_LAYER)
    token_ids = jax.random.randint(xkey, (B, T), 0, VOCAB_SIZE, jnp.int32)

    probs = text_lstm_classifier_forward(
        token_ids, params, n_layers=N_LAYER, hidden=HIDDEN_SIZE
    )
    probs = jax.block_until_ready(probs)

    ref = _reference_forward(token_ids, params,
                             n_layers=N_LAYER, hidden=HIDDEN_SIZE)
    assert probs.shape == (B, OUTPUT_SIZE)
    # bf16 MXU operands (f32 accumulation / f32 gate math) -> slightly looser
    # tolerance against the pure-f32 reference.
    assert jnp.allclose(probs, ref, atol=2e-2, rtol=2e-2)
    # Exact softmax divide -> rows sum to 1 at f32 precision.
    assert jnp.allclose(jnp.sum(probs, axis=1), 1.0, atol=1e-5)

    print("KERNEL_OK")
</pallas_src>

<mosaic_0001>
module attributes {stable_mosaic.version = 11 : i64} {
  func.func @_lstm_classifier_kernel(%arg0: i32, %arg1: memref<16x1xi32, #tpu.memory_space<vmem>>, %arg2: memref<64x128xbf16, #tpu.memory_space<vmem>>, %arg3: memref<32x128xbf16, #tpu.memory_space<vmem>>, %arg4: memref<1x64x128xbf16, #tpu.memory_space<vmem>>, %arg5: memref<2x1x128xf32, #tpu.memory_space<vmem>>, %arg6: memref<32x8xbf16, #tpu.memory_space<vmem>>, %arg7: memref<1x8xf32, #tpu.memory_space<vmem>>, %arg8: memref<2x8xf32, #tpu.memory_space<vmem>>) attributes {dimension_semantics = [#tpu.dimension_semantics<arbitrary>], iteration_bounds = array<i64: 1>, scalar_prefetch = 0 : i64, scratch_operands = 0 : i64, tpu.core_type = #tpu.core_type<tc>, window_params = [{pipeline_mode = #tpu.pipeline_mode<synchronous>, transform_indices = @transform_0, window_bounds = array<i64: 16, 1>}, {pipeline_mode = #tpu.pipeline_mode<synchronous>, transform_indices = @transform_1, window_bounds = array<i64: 64, 128>}, {pipeline_mode = #tpu.pipeline_mode<synchronous>, transform_indices = @transform_2, window_bounds = array<i64: 32, 128>}, {pipeline_mode = #tpu.pipeline_mode<synchronous>, transform_indices = @transform_3, window_bounds = array<i64: 1, 64, 128>}, {pipeline_mode = #tpu.pipeline_mode<synchronous>, transform_indices = @transform_4, window_bounds = array<i64: 2, 1, 128>}, {pipeline_mode = #tpu.pipeline_mode<synchronous>, transform_indices = @transform_5, window_bounds = array<i64: 32, 8>}, {pipeline_mode = #tpu.pipeline_mode<synchronous>, transform_indices = @transform_6, window_bounds = array<i64: 1, 8>}, {pipeline_mode = #tpu.pipeline_mode<synchronous>, transform_indices = @transform_7, window_bounds = array<i64: 2, 8>}]} {
    %c0 = arith.constant 0 : index
    %c0_0 = arith.constant 0 : index
    %0 = vector.load %arg1[%c0, %c0_0] : memref<16x1xi32, #tpu.memory_space<vmem>>, vector<16x1xi32>
    %1 = tpu.iota {dimensions = array<i32: 1>} : vector<16x64xi32>
    %2 = vector.broadcast %0 : vector<16x1xi32> to vector<16x64xi32>
    %3 = arith.cmpi eq, %1, %2 : vector<16x64xi32>
    %4 = arith.extui %3 : vector<16x64xi1> to vector<16x64xi32>
    %5 = arith.sitofp %4 : vector<16x64xi32> to vector<16x64xf32>
    %6 = arith.truncf %5 : vector<16x64xf32> to vector<16x64xbf16>
    %c0_1 = arith.constant 0 : index
    %c0_2 = arith.constant 0 : index
    %7 = vector.load %arg2[%c0_1, %c0_2] : memref<64x128xbf16, #tpu.memory_space<vmem>>, vector<64x128xbf16>
    %cst = arith.constant dense<0.000000e+00> : vector<16x128xf32>
    %8 = tpu.matmul %6, %7, %cst {dimension_numbers = #tpu.dot_dimension_numbers<[1], [0], [0], [1], [0, 0, 1, 1], [], []>} : vector<16x64xbf16>, vector<64x128xbf16>, vector<16x128xf32> -> vector<16x128xf32>
    %c0_3 = arith.constant 0 : index
    %c0_4 = arith.constant 0 : index
    %c0_5 = arith.constant 0 : index
    %9 = vector.load %arg5[%c0_3, %c0_4, %c0_5] : memref<2x1x128xf32, #tpu.memory_space<vmem>>, vector<1x1x128xf32>
    %10 = vector.shape_cast %9 : vector<1x1x128xf32> to vector<1x128xf32>
    %11 = vector.broadcast %10 : vector<1x128xf32> to vector<16x128xf32>
    %12 = arith.addf %8, %11 : vector<16x128xf32>
    %c0_6 = arith.constant 0 : index
    %c0_7 = arith.constant 0 : index
    %13 = vector.load %arg3[%c0_6, %c0_7] : memref<32x128xbf16, #tpu.memory_space<vmem>>, vector<32x128xbf16>
    %cst_8 = arith.constant 0.000000e+00 : f32
    %14 = vector.broadcast %cst_8 : f32 to vector<2x32xf32>
    %cst_9 = arith.constant 0.000000e+00 : f32
    %15 = vector.broadcast %cst_9 : f32 to vector<2x32xf32>
    %16 = vector.extract_strided_slice %12 {offsets = [0, 0], sizes = [2, 128], strides = [1, 1]} : vector<16x128xf32> to vector<2x128xf32>
    %17 = arith.truncf %14 : vector<2x32xf32> to vector<2x32xbf16>
    %cst_10 = arith.constant dense<0.000000e+00> : vector<2x128xf32>
    %18 = tpu.matmul %17, %13, %cst_10 {dimension_numbers = #tpu.dot_dimension_numbers<[1], [0], [0], [1], [0, 0, 1, 1], [], []>} : vector<2x32xbf16>, vector<32x128xbf16>, vector<2x128xf32> -> vector<2x128xf32>
    %19 = arith.addf %16, %18 : vector<2x128xf32>
    %20 = vector.extract_strided_slice %19 {offsets = [0, 0], sizes = [2, 96], strides = [1, 1]} : vector<2x128xf32> to vector<2x96xf32>
    %21 = arith.negf %20 : vector<2x96xf32>
    %22 = math.exp %21 : vector<2x96xf32>
    %cst_11 = arith.constant 1.000000e+00 : f32
    %23 = vector.broadcast %cst_11 : f32 to vector<2x96xf32>
    %24 = arith.addf %23, %22 : vector<2x96xf32>
    %25 = arith.divf %23, %24 : vector<2x96xf32>
    %26 = vector.extract_strided_slice %19 {offsets = [0, 96], sizes = [2, 32], strides = [1, 1]} : vector<2x128xf32> to vector<2x32xf32>
    %27 = math.tanh %26 : vector<2x32xf32>
    %28 = vector.extract_strided_slice %25 {offsets = [0, 0], sizes = [2, 32], strides = [1, 1]} : vector<2x96xf32> to vector<2x32xf32>
    %29 = vector.extract_strided_slice %25 {offsets = [0, 32], sizes = [2, 32], strides = [1, 1]} : vector<2x96xf32> to vector<2x32xf32>
    %30 = vector.extract_strided_slice %25 {offsets = [0, 64], sizes = [2, 32], strides = [1, 1]} : vector<2x96xf32> to vector<2x32xf32>
    %31 = arith.mulf %29, %15 : vector<2x32xf32>
    %32 = arith.mulf %28, %27 : vector<2x32xf32>
    %33 = arith.addf %31, %32 : vector<2x32xf32>
    %34 = math.tanh %33 : vector<2x32xf32>
    %35 = arith.mulf %30, %34 : vector<2x32xf32>
    %36 = vector.extract_strided_slice %12 {offsets = [2, 0], sizes = [2, 128], strides = [1, 1]} : vector<16x128xf32> to vector<2x128xf32>
    %37 = arith.truncf %35 : vector<2x32xf32> to vector<2x32xbf16>
    %cst_12 = arith.constant dense<0.000000e+00> : vector<2x128xf32>
    %38 = tpu.matmul %37, %13, %cst_12 {dimension_numbers = #tpu.dot_dimension_numbers<[1], [0], [0], [1], [0, 0, 1, 1], [], []>} : vector<2x32xbf16>, vector<32x128xbf16>, vector<2x128xf32> -> vector<2x128xf32>
    %39 = arith.addf %36, %38 : vector<2x128xf32>
    %40 = vector.extract_strided_slice %39 {offsets = [0, 0], sizes = [2, 96], strides = [1, 1]} : vector<2x128xf32> to vector<2x96xf32>
    %41 = arith.negf %40 : vector<2x96xf32>
    %42 = math.exp %41 : vector<2x96xf32>
    %cst_13 = arith.constant 1.000000e+00 : f32
    %43 = vector.broadcast %cst_13 : f32 to vector<2x96xf32>
    %44 = arith.addf %43, %42 : vector<2x96xf32>
    %45 = arith.divf %43, %44 : vector<2x96xf32>
    %46 = vector.extract_strided_slice %39 {offsets = [0, 96], sizes = [2, 32], strides = [1, 1]} : vector<2x128xf32> to vector<2x32xf32>
    %47 = math.tanh %46 : vector<2x32xf32>
    %48 = vector.extract_strided_slice %45 {offsets = [0, 0], sizes = [2, 32], strides = [1, 1]} : vector<2x96xf32> to vector<2x32xf32>
    %49 = vector.extract_strided_slice %45 {offsets = [0, 32], sizes = [2, 32], strides = [1, 1]} : vector<2x96xf32> to vector<2x32xf32>
    %50 = vector.extract_strided_slice %45 {offsets = [0, 64], sizes = [2, 32], strides = [1, 1]} : vector<2x96xf32> to vector<2x32xf32>
    %51 = arith.mulf %49, %33 : vector<2x32xf32>
    %52 = arith.mulf %48, %47 : vector<2x32xf32>
    %53 = arith.addf %51, %52 : vector<2x32xf32>
    %54 = math.tanh %53 : vector<2x32xf32>
    %55 = arith.mulf %50, %54 : vector<2x32xf32>
    %56 = vector.extract_strided_slice %12 {offsets = [4, 0], sizes = [2, 128], strides = [1, 1]} : vector<16x128xf32> to vector<2x128xf32>
    %57 = arith.truncf %55 : vector<2x32xf32> to vector<2x32xbf16>
    %cst_14 = arith.constant dense<0.000000e+00> : vector<2x128xf32>
    %58 = tpu.matmul %57, %13, %cst_14 {dimension_numbers = #tpu.dot_dimension_numbers<[1], [0], [0], [1], [0, 0, 1, 1], [], []>} : vector<2x32xbf16>, vector<32x128xbf16>, vector<2x128xf32> -> vector<2x128xf32>
    %59 = arith.addf %56, %58 : vector<2x128xf32>
    %60 = vector.extract_strided_slice %59 {offsets = [0, 0], sizes = [2, 96], strides = [1, 1]} : vector<2x128xf32> to vector<2x96xf32>
    %61 = arith.negf %60 : vector<2x96xf32>
    %62 = math.exp %61 : vector<2x96xf32>
    %cst_15 = arith.constant 1.000000e+00 : f32
    %63 = vector.broadcast %cst_15 : f32 to vector<2x96xf32>
    %64 = arith.addf %63, %62 : vector<2x96xf32>
    %65 = arith.divf %63, %64 : vector<2x96xf32>
    %66 = vector.extract_strided_slice %59 {offsets = [0, 96], sizes = [2, 32], strides = [1, 1]} : vector<2x128xf32> to vector<2x32xf32>
    %67 = math.tanh %66 : vector<2x32xf32>
    %68 = vector.extract_strided_slice %65 {offsets = [0, 0], sizes = [2, 32], strides = [1, 1]} : vector<2x96xf32> to vector<2x32xf32>
    %69 = vector.extract_strided_slice %65 {offsets = [0, 32], sizes = [2, 32], strides = [1, 1]} : vector<2x96xf32> to vector<2x32xf32>
    %70 = vector.extract_strided_slice %65 {offsets = [0, 64], sizes = [2, 32], strides = [1, 1]} : vector<2x96xf32> to vector<2x32xf32>
    %71 = arith.mulf %69, %53 : vector<2x32xf32>
    %72 = arith.mulf %68, %67 : vector<2x32xf32>
    %73 = arith.addf %71, %72 : vector<2x32xf32>
    %74 = math.tanh %73 : vector<2x32xf32>
    %75 = arith.mulf %70, %74 : vector<2x32xf32>
    %76 = vector.extract_strided_slice %12 {offsets = [6, 0], sizes = [2, 128], strides = [1, 1]} : vector<16x128xf32> to vector<2x128xf32>
    %77 = arith.truncf %75 : vector<2x32xf32> to vector<2x32xbf16>
    %cst_16 = arith.constant dense<0.000000e+00> : vector<2x128xf32>
    %78 = tpu.matmul %77, %13, %cst_16 {dimension_numbers = #tpu.dot_dimension_numbers<[1], [0], [0], [1], [0, 0, 1, 1], [], []>} : vector<2x32xbf16>, vector<32x128xbf16>, vector<2x128xf32> -> vector<2x128xf32>
    %79 = arith.addf %76, %78 : vector<2x128xf32>
    %80 = vector.extract_strided_slice %79 {offsets = [0, 0], sizes = [2, 96], strides = [1, 1]} : vector<2x128xf32> to vector<2x96xf32>
    %81 = arith.negf %80 : vector<2x96xf32>
    %82 = math.exp %81 : vector<2x96xf32>
    %cst_17 = arith.constant 1.000000e+00 : f32
    %83 = vector.broadcast %cst_17 : f32 to vector<2x96xf32>
    %84 = arith.addf %83, %82 : vector<2x96xf32>
    %85 = arith.divf %83, %84 : vector<2x96xf32>
    %86 = vector.extract_strided_slice %79 {offsets = [0, 96], sizes = [2, 32], strides = [1, 1]} : vector<2x128xf32> to vector<2x32xf32>
    %87 = math.tanh %86 : vector<2x32xf32>
    %88 = vector.extract_strided_slice %85 {offsets = [0, 0], sizes = [2, 32], strides = [1, 1]} : vector<2x96xf32> to vector<2x32xf32>
    %89 = vector.extract_strided_slice %85 {offsets = [0, 32], sizes = [2, 32], strides = [1, 1]} : vector<2x96xf32> to vector<2x32xf32>
    %90 = vector.extract_strided_slice %85 {offsets = [0, 64], sizes = [2, 32], strides = [1, 1]} : vector<2x96xf32> to vector<2x32xf32>
    %91 = arith.mulf %89, %73 : vector<2x32xf32>
    %92 = arith.mulf %88, %87 : vector<2x32xf32>
    %93 = arith.addf %91, %92 : vector<2x32xf32>
    %94 = math.tanh %93 : vector<2x32xf32>
    %95 = arith.mulf %90, %94 : vector<2x32xf32>
    %96 = vector.extract_strided_slice %12 {offsets = [8, 0], sizes = [2, 128], strides = [1, 1]} : vector<16x128xf32> to vector<2x128xf32>
    %97 = arith.truncf %95 : vector<2x32xf32> to vector<2x32xbf16>
    %cst_18 = arith.constant dense<0.000000e+00> : vector<2x128xf32>
    %98 = tpu.matmul %97, %13, %cst_18 {dimension_numbers = #tpu.dot_dimension_numbers<[1], [0], [0], [1], [0, 0, 1, 1], [], []>} : vector<2x32xbf16>, vector<32x128xbf16>, vector<2x128xf32> -> vector<2x128xf32>
    %99 = arith.addf %96, %98 : vector<2x128xf32>
    %100 = vector.extract_strided_slice %99 {offsets = [0, 0], sizes = [2, 96], strides = [1, 1]} : vector<2x128xf32> to vector<2x96xf32>
    %101 = arith.negf %100 : vector<2x96xf32>
    %102 = math.exp %101 : vector<2x96xf32>
    %cst_19 = arith.constant 1.000000e+00 : f32
    %103 = vector.broadcast %cst_19 : f32 to vector<2x96xf32>
    %104 = arith.addf %103, %102 : vector<2x96xf32>
    %105 = arith.divf %103, %104 : vector<2x96xf32>
    %106 = vector.extract_strided_slice %99 {offsets = [0, 96], sizes = [2, 32], strides = [1, 1]} : vector<2x128xf32> to vector<2x32xf32>
    %107 = math.tanh %106 : vector<2x32xf32>
    %108 = vector.extract_strided_slice %105 {offsets = [0, 0], sizes = [2, 32], strides = [1, 1]} : vector<2x96xf32> to vector<2x32xf32>
    %109 = vector.extract_strided_slice %105 {offsets = [0, 32], sizes = [2, 32], strides = [1, 1]} : vector<2x96xf32> to vector<2x32xf32>
    %110 = vector.extract_strided_slice %105 {offsets = [0, 64], sizes = [2, 32], strides = [1, 1]} : vector<2x96xf32> to vector<2x32xf32>
    %111 = arith.mulf %109, %93 : vector<2x32xf32>
    %112 = arith.mulf %108, %107 : vector<2x32xf32>
    %113 = arith.addf %111, %112 : vector<2x32xf32>
    %114 = math.tanh %113 : vector<2x32xf32>
    %115 = arith.mulf %110, %114 : vector<2x32xf32>
    %116 = vector.extract_strided_slice %12 {offsets = [10, 0], sizes = [2, 128], strides = [1, 1]} : vector<16x128xf32> to vector<2x128xf32>
    %117 = arith.truncf %115 : vector<2x32xf32> to vector<2x32xbf16>
    %cst_20 = arith.constant dense<0.000000e+00> : vector<2x128xf32>
    %118 = tpu.matmul %117, %13, %cst_20 {dimension_numbers = #tpu.dot_dimension_numbers<[1], [0], [0], [1], [0, 0, 1, 1], [], []>} : vector<2x32xbf16>, vector<32x128xbf16>, vector<2x128xf32> -> vector<2x128xf32>
    %119 = arith.addf %116, %118 : vector<2x128xf32>
    %120 = vector.extract_strided_slice %119 {offsets = [0, 0], sizes = [2, 96], strides = [1, 1]} : vector<2x128xf32> to vector<2x96xf32>
    %121 = arith.negf %120 : vector<2x96xf32>
    %122 = math.exp %121 : vector<2x96xf32>
    %cst_21 = arith.constant 1.000000e+00 : f32
    %123 = vector.broadcast %cst_21 : f32 to vector<2x96xf32>
    %124 = arith.addf %123, %122 : vector<2x96xf32>
    %125 = arith.divf %123, %124 : vector<2x96xf32>
    %126 = vector.extract_strided_slice %119 {offsets = [0, 96], sizes = [2, 32], strides = [1, 1]} : vector<2x128xf32> to vector<2x32xf32>
    %127 = math.tanh %126 : vector<2x32xf32>
    %128 = vector.extract_strided_slice %125 {offsets = [0, 0], sizes = [2, 32], strides = [1, 1]} : vector<2x96xf32> to vector<2x32xf32>
    %129 = vector.extract_strided_slice %125 {offsets = [0, 32], sizes = [2, 32], strides = [1, 1]} : vector<2x96xf32> to vector<2x32xf32>
    %130 = vector.extract_strided_slice %125 {offsets = [0, 64], sizes = [2, 32], strides = [1, 1]} : vector<2x96xf32> to vector<2x32xf32>
    %131 = arith.mulf %129, %113 : vector<2x32xf32>
    %132 = arith.mulf %128, %127 : vector<2x32xf32>
    %133 = arith.addf %131, %132 : vector<2x32xf32>
    %134 = math.tanh %133 : vector<2x32xf32>
    %135 = arith.mulf %130, %134 : vector<2x32xf32>
    %136 = vector.extract_strided_slice %12 {offsets = [12, 0], sizes = [2, 128], strides = [1, 1]} : vector<16x128xf32> to vector<2x128xf32>
    %137 = arith.truncf %135 : vector<2x32xf32> to vector<2x32xbf16>
    %cst_22 = arith.constant dense<0.000000e+00> : vector<2x128xf32>
    %138 = tpu.matmul %137, %13, %cst_22 {dimension_numbers = #tpu.dot_dimension_numbers<[1], [0], [0], [1], [0, 0, 1, 1], [], []>} : vector<2x32xbf16>, vector<32x128xbf16>, vector<2x128xf32> -> vector<2x128xf32>
    %139 = arith.addf %136, %138 : vector<2x128xf32>
    %140 = vector.extract_strided_slice %139 {offsets = [0, 0], sizes = [2, 96], strides = [1, 1]} : vector<2x128xf32> to vector<2x96xf32>
    %141 = arith.negf %140 : vector<2x96xf32>
    %142 = math.exp %141 : vector<2x96xf32>
    %cst_23 = arith.constant 1.000000e+00 : f32
    %143 = vector.broadcast %cst_23 : f32 to vector<2x96xf32>
    %144 = arith.addf %143, %142 : vector<2x96xf32>
    %145 = arith.divf %143, %144 : vector<2x96xf32>
    %146 = vector.extract_strided_slice %139 {offsets = [0, 96], sizes = [2, 32], strides = [1, 1]} : vector<2x128xf32> to vector<2x32xf32>
    %147 = math.tanh %146 : vector<2x32xf32>
    %148 = vector.extract_strided_slice %145 {offsets = [0, 0], sizes = [2, 32], strides = [1, 1]} : vector<2x96xf32> to vector<2x32xf32>
    %149 = vector.extract_strided_slice %145 {offsets = [0, 32], sizes = [2, 32], strides = [1, 1]} : vector<2x96xf32> to vector<2x32xf32>
    %150 = vector.extract_strided_slice %145 {offsets = [0, 64], sizes = [2, 32], strides = [1, 1]} : vector<2x96xf32> to vector<2x32xf32>
    %151 = arith.mulf %149, %133 : vector<2x32xf32>
    %152 = arith.mulf %148, %147 : vector<2x32xf32>
    %153 = arith.addf %151, %152 : vector<2x32xf32>
    %154 = math.tanh %153 : vector<2x32xf32>
    %155 = arith.mulf %150, %154 : vector<2x32xf32>
    %156 = vector.extract_strided_slice %12 {offsets = [14, 0], sizes = [2, 128], strides = [1, 1]} : vector<16x128xf32> to vector<2x128xf32>
    %157 = arith.truncf %155 : vector<2x32xf32> to vector<2x32xbf16>
    %cst_24 = arith.constant dense<0.000000e+00> : vector<2x128xf32>
    %158 = tpu.matmul %157, %13, %cst_24 {dimension_numbers = #tpu.dot_dimension_numbers<[1], [0], [0], [1], [0, 0, 1, 1], [], []>} : vector<2x32xbf16>, vector<32x128xbf16>, vector<2x128xf32> -> vector<2x128xf32>
    %159 = arith.addf %156, %158 : vector<2x128xf32>
    %160 = vector.extract_strided_slice %159 {offsets = [0, 0], sizes = [2, 96], strides = [1, 1]} : vector<2x128xf32> to vector<2x96xf32>
    %161 = arith.negf %160 : vector<2x96xf32>
    %162 = math.exp %161 : vector<2x96xf32>
    %cst_25 = arith.constant 1.000000e+00 : f32
    %163 = vector.broadcast %cst_25 : f32 to vector<2x96xf32>
    %164 = arith.addf %163, %162 : vector<2x96xf32>
    %165 = arith.divf %163, %164 : vector<2x96xf32>
    %166 = vector.extract_strided_slice %159 {offsets = [0, 96], sizes = [2, 32], strides = [1, 1]} : vector<2x128xf32> to vector<2x32xf32>
    %167 = math.tanh %166 : vector<2x32xf32>
    %168 = vector.extract_strided_slice %165 {offsets = [0, 0], sizes = [2, 32], strides = [1, 1]} : vector<2x96xf32> to vector<2x32xf32>
    %169 = vector.extract_strided_slice %165 {offsets = [0, 32], sizes = [2, 32], strides = [1, 1]} : vector<2x96xf32> to vector<2x32xf32>
    %170 = vector.extract_strided_slice %165 {offsets = [0, 64], sizes = [2, 32], strides = [1, 1]} : vector<2x96xf32> to vector<2x32xf32>
    %171 = arith.mulf %169, %153 : vector<2x32xf32>
    %172 = arith.mulf %168, %167 : vector<2x32xf32>
    %173 = arith.addf %171, %172 : vector<2x32xf32>
    %174 = math.tanh %173 : vector<2x32xf32>
    %175 = arith.mulf %170, %174 : vector<2x32xf32>
    %c0_26 = arith.constant 0 : index
    %c0_27 = arith.constant 0 : index
    %c0_28 = arith.constant 0 : index
    %176 = vector.load %arg4[%c0_26, %c0_27, %c0_28] : memref<1x64x128xbf16, #tpu.memory_space<vmem>>, vector<1x64x128xbf16>
    %177 = vector.shape_cast %176 : vector<1x64x128xbf16> to vector<64x128xbf16>
    %c1 = arith.constant 1 : index
    %c0_29 = arith.constant 0 : index
    %c0_30 = arith.constant 0 : index
    %178 = vector.load %arg5[%c1, %c0_29, %c0_30] : memref<2x1x128xf32, #tpu.memory_space<vmem>>, vector<1x1x128xf32>
    %179 = vector.shape_cast %178 : vector<1x1x128xf32> to vector<1x128xf32>
    %cst_31 = arith.constant 0.000000e+00 : f32
    %180 = vector.broadcast %cst_31 : f32 to vector<2x32xf32>
    %cst_32 = arith.constant 0.000000e+00 : f32
    %181 = vector.broadcast %cst_32 : f32 to vector<2x32xf32>
    %182 = tpu.concatenate %35, %180 in 1 : vector<2x32xf32>, vector<2x32xf32> -> vector<2x64xf32>
    %183 = arith.truncf %182 : vector<2x64xf32> to vector<2x64xbf16>
    %cst_33 = arith.constant dense<0.000000e+00> : vector<2x128xf32>
    %184 = tpu.matmul %183, %177, %cst_33 {dimension_numbers = #tpu.dot_dimension_numbers<[1], [0], [0], [1], [0, 0, 1, 1], [], []>} : vector<2x64xbf16>, vector<64x128xbf16>, vector<2x128xf32> -> vector<2x128xf32>
    %185 = vector.broadcast %179 : vector<1x128xf32> to vector<2x128xf32>
    %186 = arith.addf %184, %185 : vector<2x128xf32>
    %187 = vector.extract_strided_slice %186 {offsets = [0, 0], sizes = [2, 96], strides = [1, 1]} : vector<2x128xf32> to vector<2x96xf32>
    %188 = arith.negf %187 : vector<2x96xf32>
    %189 = math.exp %188 : vector<2x96xf32>
    %cst_34 = arith.constant 1.000000e+00 : f32
    %190 = vector.broadcast %cst_34 : f32 to vector<2x96xf32>
    %191 = arith.addf %190, %189 : vector<2x96xf32>
    %192 = arith.divf %190, %191 : vector<2x96xf32>
    %193 = vector.extract_strided_slice %186 {offsets = [0, 96], sizes = [2, 32], strides = [1, 1]} : vector<2x128xf32> to vector<2x32xf32>
    %194 = math.tanh %193 : vector<2x32xf32>
    %195 = vector.extract_strided_slice %192 {offsets = [0, 0], sizes = [2, 32], strides = [1, 1]} : vector<2x96xf32> to vector<2x32xf32>
    %196 = vector.extract_strided_slice %192 {offsets = [0, 32], sizes = [2, 32], strides = [1, 1]} : vector<2x96xf32> to vector<2x32xf32>
    %197 = vector.extract_strided_slice %192 {offsets = [0, 64], sizes = [2, 32], strides = [1, 1]} : vector<2x96xf32> to vector<2x32xf32>
    %198 = arith.mulf %196, %181 : vector<2x32xf32>
    %199 = arith.mulf %195, %194 : vector<2x32xf32>
    %200 = arith.addf %198, %199 : vector<2x32xf32>
    %201 = math.tanh %200 : vector<2x32xf32>
    %202 = arith.mulf %197, %201 : vector<2x32xf32>
    %203 = tpu.concatenate %55, %202 in 1 : vector<2x32xf32>, vector<2x32xf32> -> vector<2x64xf32>
    %204 = arith.truncf %203 : vector<2x64xf32> to vector<2x64xbf16>
    %cst_35 = arith.constant dense<0.000000e+00> : vector<2x128xf32>
    %205 = tpu.matmul %204, %177, %cst_35 {dimension_numbers = #tpu.dot_dimension_numbers<[1], [0], [0], [1], [0, 0, 1, 1], [], []>} : vector<2x64xbf16>, vector<64x128xbf16>, vector<2x128xf32> -> vector<2x128xf32>
    %206 = vector.broadcast %179 : vector<1x128xf32> to vector<2x128xf32>
    %207 = arith.addf %205, %206 : vector<2x128xf32>
    %208 = vector.extract_strided_slice %207 {offsets = [0, 0], sizes = [2, 96], strides = [1, 1]} : vector<2x128xf32> to vector<2x96xf32>
    %209 = arith.negf %208 : vector<2x96xf32>
    %210 = math.exp %209 : vector<2x96xf32>
    %cst_36 = arith.constant 1.000000e+00 : f32
    %211 = vector.broadcast %cst_36 : f32 to vector<2x96xf32>
    %212 = arith.addf %211, %210 : vector<2x96xf32>
    %213 = arith.divf %211, %212 : vector<2x96xf32>
    %214 = vector.extract_strided_slice %207 {offsets = [0, 96], sizes = [2, 32], strides = [1, 1]} : vector<2x128xf32> to vector<2x32xf32>
    %215 = math.tanh %214 : vector<2x32xf32>
    %216 = vector.extract_strided_slice %213 {offsets = [0, 0], sizes = [2, 32], strides = [1, 1]} : vector<2x96xf32> to vector<2x32xf32>
    %217 = vector.extract_strided_slice %213 {offsets = [0, 32], sizes = [2, 32], strides = [1, 1]} : vector<2x96xf32> to vector<2x32xf32>
    %218 = vector.extract_strided_slice %213 {offsets = [0, 64], sizes = [2, 32], strides = [1, 1]} : vector<2x96xf32> to vector<2x32xf32>
    %219 = arith.mulf %217, %200 : vector<2x32xf32>
    %220 = arith.mulf %216, %215 : vector<2x32xf32>
    %221 = arith.addf %219, %220 : vector<2x32xf32>
    %222 = math.tanh %221 : vector<2x32xf32>
    %223 = arith.mulf %218, %222 : vector<2x32xf32>
    %224 = tpu.concatenate %75, %223 in 1 : vector<2x32xf32>, vector<2x32xf32> -> vector<2x64xf32>
    %225 = arith.truncf %224 : vector<2x64xf32> to vector<2x64xbf16>
    %cst_37 = arith.constant dense<0.000000e+00> : vector<2x128xf32>
    %226 = tpu.matmul %225, %177, %cst_37 {dimension_numbers = #tpu.dot_dimension_numbers<[1], [0], [0], [1], [0, 0, 1, 1], [], []>} : vector<2x64xbf16>, vector<64x128xbf16>, vector<2x128xf32> -> vector<2x128xf32>
    %227 = vector.broadcast %179 : vector<1x128xf32> to vector<2x128xf32>
    %228 = arith.addf %226, %227 : vector<2x128xf32>
    %229 = vector.extract_strided_slice %228 {offsets = [0, 0], sizes = [2, 96], strides = [1, 1]} : vector<2x128xf32> to vector<2x96xf32>
    %230 = arith.negf %229 : vector<2x96xf32>
    %231 = math.exp %230 : vector<2x96xf32>
    %cst_38 = arith.constant 1.000000e+00 : f32
    %232 = vector.broadcast %cst_38 : f32 to vector<2x96xf32>
    %233 = arith.addf %232, %231 : vector<2x96xf32>
    %234 = arith.divf %232, %233 : vector<2x96xf32>
    %235 = vector.extract_strided_slice %228 {offsets = [0, 96], sizes = [2, 32], strides = [1, 1]} : vector<2x128xf32> to vector<2x32xf32>
    %236 = math.tanh %235 : vector<2x32xf32>
    %237 = vector.extract_strided_slice %234 {offsets = [0, 0], sizes = [2, 32], strides = [1, 1]} : vector<2x96xf32> to vector<2x32xf32>
    %238 = vector.extract_strided_slice %234 {offsets = [0, 32], sizes = [2, 32], strides = [1, 1]} : vector<2x96xf32> to vector<2x32xf32>
    %239 = vector.extract_strided_slice %234 {offsets = [0, 64], sizes = [2, 32], strides = [1, 1]} : vector<2x96xf32> to vector<2x32xf32>
    %240 = arith.mulf %238, %221 : vector<2x32xf32>
    %241 = arith.mulf %237, %236 : vector<2x32xf32>
    %242 = arith.addf %240, %241 : vector<2x32xf32>
    %243 = math.tanh %242 : vector<2x32xf32>
    %244 = arith.mulf %239, %243 : vector<2x32xf32>
    %245 = tpu.concatenate %95, %244 in 1 : vector<2x32xf32>, vector<2x32xf32> -> vector<2x64xf32>
    %246 = arith.truncf %245 : vector<2x64xf32> to vector<2x64xbf16>
    %cst_39 = arith.constant dense<0.000000e+00> : vector<2x128xf32>
    %247 = tpu.matmul %246, %177, %cst_39 {dimension_numbers = #tpu.dot_dimension_numbers<[1], [0], [0], [1], [0, 0, 1, 1], [], []>} : vector<2x64xbf16>, vector<64x128xbf16>, vector<2x128xf32> -> vector<2x128xf32>
    %248 = vector.broadcast %179 : vector<1x128xf32> to vector<2x128xf32>
    %249 = arith.addf %247, %248 : vector<2x128xf32>
    %250 = vector.extract_strided_slice %249 {offsets = [0, 0], sizes = [2, 96], strides = [1, 1]} : vector<2x128xf32> to vector<2x96xf32>
    %251 = arith.negf %250 : vector<2x96xf32>
    %252 = math.exp %251 : vector<2x96xf32>
    %cst_40 = arith.constant 1.000000e+00 : f32
    %253 = vector.broadcast %cst_40 : f32 to vector<2x96xf32>
    %254 = arith.addf %253, %252 : vector<2x96xf32>
    %255 = arith.divf %253, %254 : vector<2x96xf32>
    %256 = vector.extract_strided_slice %249 {offsets = [0, 96], sizes = [2, 32], strides = [1, 1]} : vector<2x128xf32> to vector<2x32xf32>
    %257 = math.tanh %256 : vector<2x32xf32>
    %258 = vector.extract_strided_slice %255 {offsets = [0, 0], sizes = [2, 32], strides = [1, 1]} : vector<2x96xf32> to vector<2x32xf32>
    %259 = vector.extract_strided_slice %255 {offsets = [0, 32], sizes = [2, 32], strides = [1, 1]} : vector<2x96xf32> to vector<2x32xf32>
    %260 = vector.extract_strided_slice %255 {offsets = [0, 64], sizes = [2, 32], strides = [1, 1]} : vector<2x96xf32> to vector<2x32xf32>
    %261 = arith.mulf %259, %242 : vector<2x32xf32>
    %262 = arith.mulf %258, %257 : vector<2x32xf32>
    %263 = arith.addf %261, %262 : vector<2x32xf32>
    %264 = math.tanh %263 : vector<2x32xf32>
    %265 = arith.mulf %260, %264 : vector<2x32xf32>
    %266 = tpu.concatenate %115, %265 in 1 : vector<2x32xf32>, vector<2x32xf32> -> vector<2x64xf32>
    %267 = arith.truncf %266 : vector<2x64xf32> to vector<2x64xbf16>
    %cst_41 = arith.constant dense<0.000000e+00> : vector<2x128xf32>
    %268 = tpu.matmul %267, %177, %cst_41 {dimension_numbers = #tpu.dot_dimension_numbers<[1], [0], [0], [1], [0, 0, 1, 1], [], []>} : vector<2x64xbf16>, vector<64x128xbf16>, vector<2x128xf32> -> vector<2x128xf32>
    %269 = vector.broadcast %179 : vector<1x128xf32> to vector<2x128xf32>
    %270 = arith.addf %268, %269 : vector<2x128xf32>
    %271 = vector.extract_strided_slice %270 {offsets = [0, 0], sizes = [2, 96], strides = [1, 1]} : vector<2x128xf32> to vector<2x96xf32>
    %272 = arith.negf %271 : vector<2x96xf32>
    %273 = math.exp %272 : vector<2x96xf32>
    %cst_42 = arith.constant 1.000000e+00 : f32
    %274 = vector.broadcast %cst_42 : f32 to vector<2x96xf32>
    %275 = arith.addf %274, %273 : vector<2x96xf32>
    %276 = arith.divf %274, %275 : vector<2x96xf32>
    %277 = vector.extract_strided_slice %270 {offsets = [0, 96], sizes = [2, 32], strides = [1, 1]} : vector<2x128xf32> to vector<2x32xf32>
    %278 = math.tanh %277 : vector<2x32xf32>
    %279 = vector.extract_strided_slice %276 {offsets = [0, 0], sizes = [2, 32], strides = [1, 1]} : vector<2x96xf32> to vector<2x32xf32>
    %280 = vector.extract_strided_slice %276 {offsets = [0, 32], sizes = [2, 32], strides = [1, 1]} : vector<2x96xf32> to vector<2x32xf32>
    %281 = vector.extract_strided_slice %276 {offsets = [0, 64], sizes = [2, 32], strides = [1, 1]} : vector<2x96xf32> to vector<2x32xf32>
    %282 = arith.mulf %280, %263 : vector<2x32xf32>
    %283 = arith.mulf %279, %278 : vector<2x32xf32>
    %284 = arith.addf %282, %283 : vector<2x32xf32>
    %285 = math.tanh %284 : vector<2x32xf32>
    %286 = arith.mulf %281, %285 : vector<2x32xf32>
    %287 = tpu.concatenate %135, %286 in 1 : vector<2x32xf32>, vector<2x32xf32> -> vector<2x64xf32>
    %288 = arith.truncf %287 : vector<2x64xf32> to vector<2x64xbf16>
    %cst_43 = arith.constant dense<0.000000e+00> : vector<2x128xf32>
    %289 = tpu.matmul %288, %177, %cst_43 {dimension_numbers = #tpu.dot_dimension_numbers<[1], [0], [0], [1], [0, 0, 1, 1], [], []>} : vector<2x64xbf16>, vector<64x128xbf16>, vector<2x128xf32> -> vector<2x128xf32>
    %290 = vector.broadcast %179 : vector<1x128xf32> to vector<2x128xf32>
    %291 = arith.addf %289, %290 : vector<2x128xf32>
    %292 = vector.extract_strided_slice %291 {offsets = [0, 0], sizes = [2, 96], strides = [1, 1]} : vector<2x128xf32> to vector<2x96xf32>
    %293 = arith.negf %292 : vector<2x96xf32>
    %294 = math.exp %293 : vector<2x96xf32>
    %cst_44 = arith.constant 1.000000e+00 : f32
    %295 = vector.broadcast %cst_44 : f32 to vector<2x96xf32>
    %296 = arith.addf %295, %294 : vector<2x96xf32>
    %297 = arith.divf %295, %296 : vector<2x96xf32>
    %298 = vector.extract_strided_slice %291 {offsets = [0, 96], sizes = [2, 32], strides = [1, 1]} : vector<2x128xf32> to vector<2x32xf32>
    %299 = math.tanh %298 : vector<2x32xf32>
    %300 = vector.extract_strided_slice %297 {offsets = [0, 0], sizes = [2, 32], strides = [1, 1]} : vector<2x96xf32> to vector<2x32xf32>
    %301 = vector.extract_strided_slice %297 {offsets = [0, 32], sizes = [2, 32], strides = [1, 1]} : vector<2x96xf32> to vector<2x32xf32>
    %302 = vector.extract_strided_slice %297 {offsets = [0, 64], sizes = [2, 32], strides = [1, 1]} : vector<2x96xf32> to vector<2x32xf32>
    %303 = arith.mulf %301, %284 : vector<2x32xf32>
    %304 = arith.mulf %300, %299 : vector<2x32xf32>
    %305 = arith.addf %303, %304 : vector<2x32xf32>
    %306 = math.tanh %305 : vector<2x32xf32>
    %307 = arith.mulf %302, %306 : vector<2x32xf32>
    %308 = tpu.concatenate %155, %307 in 1 : vector<2x32xf32>, vector<2x32xf32> -> vector<2x64xf32>
    %309 = arith.truncf %308 : vector<2x64xf32> to vector<2x64xbf16>
    %cst_45 = arith.constant dense<0.000000e+00> : vector<2x128xf32>
    %310 = tpu.matmul %309, %177, %cst_45 {dimension_numbers = #tpu.dot_dimension_numbers<[1], [0], [0], [1], [0, 0, 1, 1], [], []>} : vector<2x64xbf16>, vector<64x128xbf16>, vector<2x128xf32> -> vector<2x128xf32>
    %311 = vector.broadcast %179 : vector<1x128xf32> to vector<2x128xf32>
    %312 = arith.addf %310, %311 : vector<2x128xf32>
    %313 = vector.extract_strided_slice %312 {offsets = [0, 0], sizes = [2, 96], strides = [1, 1]} : vector<2x128xf32> to vector<2x96xf32>
    %314 = arith.negf %313 : vector<2x96xf32>
    %315 = math.exp %314 : vector<2x96xf32>
    %cst_46 = arith.constant 1.000000e+00 : f32
    %316 = vector.broadcast %cst_46 : f32 to vector<2x96xf32>
    %317 = arith.addf %316, %315 : vector<2x96xf32>
    %318 = arith.divf %316, %317 : vector<2x96xf32>
    %319 = vector.extract_strided_slice %312 {offsets = [0, 96], sizes = [2, 32], strides = [1, 1]} : vector<2x128xf32> to vector<2x32xf32>
    %320 = math.tanh %319 : vector<2x32xf32>
    %321 = vector.extract_strided_slice %318 {offsets = [0, 0], sizes = [2, 32], strides = [1, 1]} : vector<2x96xf32> to vector<2x32xf32>
    %322 = vector.extract_strided_slice %318 {offsets = [0, 32], sizes = [2, 32], strides = [1, 1]} : vector<2x96xf32> to vector<2x32xf32>
    %323 = vector.extract_strided_slice %318 {offsets = [0, 64], sizes = [2, 32], strides = [1, 1]} : vector<2x96xf32> to vector<2x32xf32>
    %324 = arith.mulf %322, %305 : vector<2x32xf32>
    %325 = arith.mulf %321, %320 : vector<2x32xf32>
    %326 = arith.addf %324, %325 : vector<2x32xf32>
    %327 = math.tanh %326 : vector<2x32xf32>
    %328 = arith.mulf %323, %327 : vector<2x32xf32>
    %329 = tpu.concatenate %175, %328 in 1 : vector<2x32xf32>, vector<2x32xf32> -> vector<2x64xf32>
    %330 = arith.truncf %329 : vector<2x64xf32> to vector<2x64xbf16>
    %cst_47 = arith.constant dense<0.000000e+00> : vector<2x128xf32>
    %331 = tpu.matmul %330, %177, %cst_47 {dimension_numbers = #tpu.dot_dimension_numbers<[1], [0], [0], [1], [0, 0, 1, 1], [], []>} : vector<2x64xbf16>, vector<64x128xbf16>, vector<2x128xf32> -> vector<2x128xf32>
    %332 = vector.broadcast %179 : vector<1x128xf32> to vector<2x128xf32>
    %333 = arith.addf %331, %332 : vector<2x128xf32>
    %334 = vector.extract_strided_slice %333 {offsets = [0, 0], sizes = [2, 96], strides = [1, 1]} : vector<2x128xf32> to vector<2x96xf32>
    %335 = arith.negf %334 : vector<2x96xf32>
    %336 = math.exp %335 : vector<2x96xf32>
    %cst_48 = arith.constant 1.000000e+00 : f32
    %337 = vector.broadcast %cst_48 : f32 to vector<2x96xf32>
    %338 = arith.addf %337, %336 : vector<2x96xf32>
    %339 = arith.divf %337, %338 : vector<2x96xf32>
    %340 = vector.extract_strided_slice %333 {offsets = [0, 96], sizes = [2, 32], strides = [1, 1]} : vector<2x128xf32> to vector<2x32xf32>
    %341 = math.tanh %340 : vector<2x32xf32>
    %342 = vector.extract_strided_slice %339 {offsets = [0, 0], sizes = [2, 32], strides = [1, 1]} : vector<2x96xf32> to vector<2x32xf32>
    %343 = vector.extract_strided_slice %339 {offsets = [0, 32], sizes = [2, 32], strides = [1, 1]} : vector<2x96xf32> to vector<2x32xf32>
    %344 = vector.extract_strided_slice %339 {offsets = [0, 64], sizes = [2, 32], strides = [1, 1]} : vector<2x96xf32> to vector<2x32xf32>
    %345 = arith.mulf %343, %326 : vector<2x32xf32>
    %346 = arith.mulf %342, %341 : vector<2x32xf32>
    %347 = arith.addf %345, %346 : vector<2x32xf32>
    %348 = math.tanh %347 : vector<2x32xf32>
    %349 = arith.mulf %344, %348 : vector<2x32xf32>
    %350 = arith.truncf %349 : vector<2x32xf32> to vector<2x32xbf16>
    %c0_49 = arith.constant 0 : index
    %c0_50 = arith.constant 0 : index
    %351 = vector.load %arg6[%c0_49, %c0_50] : memref<32x8xbf16, #tpu.memory_space<vmem>>, vector<32x8xbf16>
    %cst_51 = arith.constant dense<0.000000e+00> : vector<2x8xf32>
    %352 = tpu.matmul %350, %351, %cst_51 {dimension_numbers = #tpu.dot_dimension_numbers<[1], [0], [0], [1], [0, 0, 1, 1], [], []>} : vector<2x32xbf16>, vector<32x8xbf16>, vector<2x8xf32> -> vector<2x8xf32>
    %c0_52 = arith.constant 0 : index
    %c0_53 = arith.constant 0 : index
    %353 = vector.load %arg7[%c0_52, %c0_53] : memref<1x8xf32, #tpu.memory_space<vmem>>, vector<1x8xf32>
    %354 = vector.broadcast %353 : vector<1x8xf32> to vector<2x8xf32>
    %355 = arith.addf %352, %354 : vector<2x8xf32>
    %cst_54 = arith.constant dense<0xFF800000> : vector<2xf32>
    %356 = vector.multi_reduction <maximumf>, %355, %cst_54 [1] : vector<2x8xf32> to vector<2xf32>
    %357 = vector.shape_cast %356 : vector<2xf32> to vector<2x1xf32>
    %358 = vector.broadcast %357 : vector<2x1xf32> to vector<2x8xf32>
    %359 = arith.subf %355, %358 : vector<2x8xf32>
    %360 = math.exp %359 : vector<2x8xf32>
    %cst_55 = arith.constant dense<0.000000e+00> : vector<2xf32>
    %361 = vector.multi_reduction <add>, %360, %cst_55 [1] : vector<2x8xf32> to vector<2xf32>
    %362 = vector.shape_cast %361 : vector<2xf32> to vector<2x1xf32>
    %363 = vector.broadcast %362 : vector<2x1xf32> to vector<2x8xf32>
    %364 = arith.divf %360, %363 : vector<2x8xf32>
    %c0_56 = arith.constant 0 : index
    %c0_57 = arith.constant 0 : index
    %365 = vector.load %arg8[%c0_56, %c0_57] : memref<2x8xf32, #tpu.memory_space<vmem>>, vector<2x8xf32>
    tpu.vector_store %arg8[%c0_56, %c0_57], %364 {strides = array<i32>} : memref<2x8xf32, #tpu.memory_space<vmem>>, vector<2x8xf32>,
    return
  }
  func.func @transform_0(%arg0: i32) -> (i32, i32) {
    %c0_i32 = arith.constant 0 : i32
    %c0_i32_0 = arith.constant 0 : i32
    %c0_i32_1 = arith.constant 0 : i32
    return %c0_i32, %c0_i32_0 : i32, i32
  }
  func.func @transform_1(%arg0: i32) -> (i32, i32) {
    %c0_i32 = arith.constant 0 : i32
    %c0_i32_0 = arith.constant 0 : i32
    %c0_i32_1 = arith.constant 0 : i32
    return %c0_i32, %c0_i32_0 : i32, i32
  }
  func.func @transform_2(%arg0: i32) -> (i32, i32) {
    %c0_i32 = arith.constant 0 : i32
    %c0_i32_0 = arith.constant 0 : i32
    %c0_i32_1 = arith.constant 0 : i32
    return %c0_i32, %c0_i32_0 : i32, i32
  }
  func.func @transform_3(%arg0: i32) -> (i32, i32, i32) {
    %c0_i32 = arith.constant 0 : i32
    %c0_i32_0 = arith.constant 0 : i32
    %c0_i32_1 = arith.constant 0 : i32
    %c0_i32_2 = arith.constant 0 : i32
    return %c0_i32, %c0_i32_0, %c0_i32_1 : i32, i32, i32
  }
  func.func @transform_4(%arg0: i32) -> (i32, i32, i32) {
    %c0_i32 = arith.constant 0 : i32
    %c0_i32_0 = arith.constant 0 : i32
    %c0_i32_1 = arith.constant 0 : i32
    %c0_i32_2 = arith.constant 0 : i32
    return %c0_i32, %c0_i32_0, %c0_i32_1 : i32, i32, i32
  }
  func.func @transform_5(%arg0: i32) -> (i32, i32) {
    %c0_i32 = arith.constant 0 : i32
    %c0_i32_0 = arith.constant 0 : i32
    %c0_i32_1 = arith.constant 0 : i32
    return %c0_i32, %c0_i32_0 : i32, i32
  }
  func.func @transform_6(%arg0: i32) -> (i32, i32) {
    %c0_i32 = arith.constant 0 : i32
    %c0_i32_0 = arith.constant 0 : i32
    %c0_i32_1 = arith.constant 0 : i32
    return %c0_i32, %c0_i32_0 : i32, i32
  }
  func.func @transform_7(%arg0: i32) -> (i32, i32) {
    %c0_i32 = arith.constant 0 : i32
    %c0_i32_0 = arith.constant 0 : i32
    %c0_i32_1 = arith.constant 0 : i32
    return %c0_i32, %c0_i32_0 : i32, i32
  }
}

</mosaic_0001>

<llo_original>
// kernel: tpu_custom_call.1
$region0: #{tpu_custom_call.1}
  #allocation0 [shape = 'u32[]', space=smem, size = 0x4, offset = 0x4, fixed_abs, tag = 'smem constant byte address 0x4 - core index']
  #allocation1 [shape = 'u32[144,128]{1,0:T(1,128)}', space=vmem, size = 0x12000, scoped, tag = 'internal scratch']
  %s0 = inlined_call_operand.vmem [shape: s32[16,1], index: 0, kind: input, shape index: {}]
  %s1 = inlined_call_operand.vmem [shape: bf16[64,128], index: 1, kind: input, shape index: {}]
  %s2 = inlined_call_operand.hbm [shape: bf16[32,128], index: 2, kind: input, shape index: {}]
  %s3 = inlined_call_operand.hbm [shape: bf16[1,64,128], index: 3, kind: input, shape index: {}]
  %s4 = inlined_call_operand.vmem [shape: f32[2,1,128], index: 4, kind: input, shape index: {}]
  %s5 = inlined_call_operand.vmem [shape: bf16[32,8], index: 5, kind: input, shape index: {}]
  %s6 = inlined_call_operand.vmem [shape: f32[1,8], index: 6, kind: input, shape index: {}]
  %s7 = inlined_call_operand.hbm [shape: f32[2,8], index: 7, kind: output, shape index: {}]
  %s8 = sld [smem:[#allocation0]]
  $region46: #{tpu_custom_call.1} parent=0
    _
  %s10 = ssub.s32 1, %s8
  %s11 = scalar_select 0, %s10, %s8
  $region1: #{tpu_custom_call.1} parent=0
    #allocation2 [shape = 'u8[8192]{0}', space=vmem, size = 0x2000, scoped, tag = 'input window, operand 2, single buffered']
    #allocation3 [shape = 's32[1]{0}', space=sflag, size = 0x4, scoped, tag = 'scoped memory for tpu_custom_call.1']
    #allocation4 [shape = 's32[1]{0}', space=sflag, size = 0x4, scoped, tag = 'scoped memory for tpu_custom_call.1']
    #allocation5 [shape = 'u8[16384]{0}', space=vmem, size = 0x4000, scoped, tag = 'input window, operand 3, single buffered']
    #allocation6 [shape = 's32[1]{0}', space=sflag, size = 0x4, scoped, tag = 'scoped memory for tpu_custom_call.1']
    #allocation7 [shape = 'u8[1024]{0}', space=vmem, size = 0x400, scoped, tag = 'output window, operand 0, single buffered']
    %12 = vsyncpa [#allocation3], 0
    %13 = vsyncpa [#allocation6], 0
    %14 = vsyncpa [#allocation4], 0
    // Predicated region
    $region2: #{tpu_custom_call.1} parent=1 // pred_check
      _
    $region3: #{tpu_custom_call.1} parent=1 // pred_check_branch
      %16 = sbr.rel (0) target = $region5
    $region4: #{tpu_custom_call.1} parent=1 // pred_region
      _
    $region5: #{tpu_custom_call.1} parent=1 // pred_fallthru
      _
    // Predicated region
    $region6: #{tpu_custom_call.1} parent=1 // pred_check
      _
    $region7: #{tpu_custom_call.1} parent=1 // pred_check_branch
      %18 = sbr.rel (0) target = $region9
    $region8: #{tpu_custom_call.1} parent=1 // pred_region
      _
    $region9: #{tpu_custom_call.1} parent=1 // pred_fallthru
      _
    // Predicated region
    $region10: #{tpu_custom_call.1} parent=1 // pred_check
      _
    $region11: #{tpu_custom_call.1} parent=1 // pred_check_branch
      %20 = sbr.rel (0) target = $region13
    $region12: #{tpu_custom_call.1} parent=1 // pred_region
      %s22 = ssub.s32 256, 256
      %23 = vsyncadd [#allocation3], %s22
      %s24 = sshll.u32 [#allocation2], 4
      %s25 = int_to_ptr.vmem [resolvable:$true] %s24
      %30 = dma.hbm_to_vmem [thread:$0]  %s2, 256, %s25, [#allocation3], 64, 64, 4
    $region13: #{tpu_custom_call.1} parent=1 // pred_fallthru
      _
    // Predicated region
    $region14: #{tpu_custom_call.1} parent=1 // pred_check
      _
    $region15: #{tpu_custom_call.1} parent=1 // pred_check_branch
      %32 = sbr.rel (0) target = $region17
    $region16: #{tpu_custom_call.1} parent=1 // pred_region
      %s34 = ssub.s32 512, 512
      %35 = vsyncadd [#allocation6], %s34
      %s36 = sshll.u32 [#allocation5], 4
      %s37 = int_to_ptr.vmem [resolvable:$true] %s36
      %42 = dma.hbm_to_vmem [thread:$0]  %s3, 512, %s37, [#allocation6], 64, 64, 4
    $region17: #{tpu_custom_call.1} parent=1 // pred_fallthru
      _
    // Predicated region
    $region18: #{tpu_custom_call.1} parent=1 // pred_check
      _
    $region19: #{tpu_custom_call.1} parent=1 // pred_check_branch
      %44 = sbr.rel (0) target = $region21
    $region20: #{tpu_custom_call.1} parent=1 // pred_region
      _
    $region21: #{tpu_custom_call.1} parent=1 // pred_fallthru
      _
    // Predicated region
    $region22: #{tpu_custom_call.1} parent=1 // pred_check
      _
    $region23: #{tpu_custom_call.1} parent=1 // pred_check_branch
      %46 = sbr.rel (0) target = $region25
    $region24: #{tpu_custom_call.1} parent=1 // pred_region
      _
    $region25: #{tpu_custom_call.1} parent=1 // pred_fallthru
      _
    // Predicated region
    $region26: #{tpu_custom_call.1} parent=1 // pred_check
      _
    $region27: #{tpu_custom_call.1} parent=1 // pred_check_branch
      %48 = sbr.rel (0) target = $region29
    $region28: #{tpu_custom_call.1} parent=1 // pred_region
      _
    $region29: #{tpu_custom_call.1} parent=1 // pred_fallthru
      _
    // Predicated region
    $region30: #{tpu_custom_call.1} parent=1 // pred_check
      _
    $region31: #{tpu_custom_call.1} parent=1 // pred_check_branch
      %50 = sbr.rel (0) target = $region33
    $region32: #{tpu_custom_call.1} parent=1 // pred_region
      %51 = dma.done [#allocation3], 256
    $region33: #{tpu_custom_call.1} parent=1 // pred_fallthru
      _
    // Predicated region
    $region34: #{tpu_custom_call.1} parent=1 // pred_check
      _
    $region35: #{tpu_custom_call.1} parent=1 // pred_check_branch
      %53 = sbr.rel (0) target = $region37
    $region36: #{tpu_custom_call.1} parent=1 // pred_region
      %54 = dma.done [#allocation6], 512
    $region37: #{tpu_custom_call.1} parent=1 // pred_fallthru
      _
    %v56 = vld [vmem:[%s0] sm:$0xff]
    %v57 = vld [vmem:[%s0 + $0x8] sm:$0xff]
    %v58 = vlaneseq
    %v59 = vand.u32 %v58, 127
    %60 = vset.pattern.permute.xlu0 0
    %61 = vperm.xlu0 %60, %v56
    %v62 = vpop.permute.xlu0 %61
    %63 = vset.pattern.permute.xlu0 0
    %64 = vperm.xlu0 %63, %v57
    %v65 = vpop.permute.xlu0 %64
    %vm66 = vcmp.eq.s32.totalorder %v59, %v62
    %vm67 = vcmp.eq.s32.totalorder %v59, %v65
    %v68 = vsel %vm66, 1, 0
    %v69 = vsel %vm67, 1, 0
    %v70 = vcvt.s32.f32 %v68
    %v71 = vcvt.s32.f32 %v69
    %v72 = vpack.c.bf16 %v71, %v70
    %v73 = vld [vmem:[%s1] sm:$0xf]
    %v74 = vld [vmem:[%s1 + $0x4] sm:$0xf]
    %v75 = vld [vmem:[%s1 + $0x8] sm:$0xf]
    %v76 = vld [vmem:[%s1 + $0xc] sm:$0xf]
    %v77 = vld [vmem:[%s1 + $0x10] sm:$0xf]
    %v78 = vld [vmem:[%s1 + $0x14] sm:$0xf]
    %v79 = vld [vmem:[%s1 + $0x18] sm:$0xf]
    %v80 = vld [vmem:[%s1 + $0x1c] sm:$0xf]
    %v81 = vld [vmem:[%s4] sm:$0x1]
    %v83 = vlaneseq
    %v84 = vshrl.u32 %v83, 7
    %v85 = vsub.s32 0, %v84
    %v86 = vrot.slane %v81, %v85
    %v96 = vunpack.c.l.b16 %v73
    %v97 = vunpack.c.l.b16 %v74
    %v98 = vunpack.c.l.b16 %v75
    %v99 = vunpack.c.l.b16 %v76
    %v100 = vunpack.c.l.b16 %v77
    %v101 = vunpack.c.l.b16 %v78
    %v102 = vunpack.c.l.b16 %v79
    %v103 = vunpack.c.l.b16 %v80
    %v104 = vpack.c.b16 %v97, %v96
    %v105 = vpack.c.b16 %v99, %v98
    %v106 = vpack.c.b16 %v101, %v100
    %v107 = vpack.c.b16 %v103, %v102
    %vm112 = vcmask 523264
    %v114 = vsel %vm112, %v72, 0
    %116 = vmatprep.subr.bf16.mxu0 0
    %117 = vmatpush1.bf16.msra.mxu0 0
    %118 = vmatprep.subr.bf16.mxu0 0
    %119 = vmatpush1.bf16.msra.mxu0 0
    %120 = vmatprep.subr.bf16.mxu0 0
    %121 = vmatpush1.bf16.msra.mxu0 0
    %122 = vmatprep.subr.bf16.mxu0 0
    %123 = vmatpush1.bf16.msra.mxu0 0
    %124 = vmatprep.subr.bf16.mxu0 0
    %125 = vmatpush1.bf16.msra.mxu0 %v107
    %126 = vmatprep.subr.bf16.mxu0 0
    %127 = vmatpush1.bf16.msra.mxu0 %v106
    %128 = vmatprep.subr.bf16.mxu0 0
    %129 = vmatpush1.bf16.msra.mxu0 %v105
    %130 = vmatprep.subr.bf16.mxu0 0
    %131 = vmatpush1.bf16.msra.mxu0 %v104
    %132 = vmatprep.subr.bf16.mxu0 0
    %133 = vmatpush2.bf16.msra.mxu0 0
    %134 = vmatprep.subr.bf16.mxu0 0
    %135 = vmatpush2.bf16.msra.mxu0 0
    %136 = vmatprep.subr.bf16.mxu0 0
    %137 = vmatpush2.bf16.msra.mxu0 0
    %138 = vmatprep.subr.bf16.mxu0 0
    %139 = vmatpush2.bf16.msra.mxu0 0
    %140 = vmatprep.subr.bf16.mxu0 0
    %141 = vmatpush2.bf16.msra.mxu0 0
    %142 = vmatprep.subr.bf16.mxu0 0
    %143 = vmatpush2.bf16.msra.mxu0 0
    %144 = vmatprep.subr.bf16.mxu0 0
    %145 = vmatpush2.bf16.msra.mxu0 0
    %146 = vmatprep.subr.bf16.mxu0 0
    %147 = vmatpush2.bf16.msra.mxu0 0
    %148 = vmatprep.mubr.bf16.mxu0 0
    %149 = vmatmul.mubr.bf16.gmra.mxu0 %v114
    %v150 = vpop.f32.mrf.mxu0
    %v151 = vadd.f32 %v86, %v150
    %v152 = vpop.f32.mrf.mxu0
    %v153 = vpop.f32.mrf.mxu0
    %v154 = vadd.f32 %v86, %v153
    %v155 = vpop.f32.mrf.mxu0
    %156 = vdwg.mxu0
    %v157 = vld [vmem:[#allocation2] sm:$0xf]
    %v158 = vld [vmem:[#allocation2 + $0x4] sm:$0xf]
    %v159 = vld [vmem:[#allocation2 + $0x8] sm:$0xf]
    %v160 = vld [vmem:[#allocation2 + $0xc] sm:$0xf]
    %v165 = vunpack.c.l.b16 %v157
    %v166 = vunpack.c.l.b16 %v158
    %v167 = vunpack.c.l.b16 %v159
    %v168 = vunpack.c.l.b16 %v160
    %v169 = vpack.c.b16 %v166, %v165
    %v170 = vpack.c.b16 %v168, %v167
    %vm173 = vcmask 261120
    %v175 = vsel %vm173, 0, 0
    %177 = vmatprep.subr.bf16.mxu0 0
    %178 = vmatpush1.bf16.msra.mxu0 0
    %179 = vmatprep.subr.bf16.mxu0 0
    %180 = vmatpush1.bf16.msra.mxu0 0
    %181 = vmatprep.subr.bf16.mxu0 0
    %182 = vmatpush1.bf16.msra.mxu0 0
    %183 = vmatprep.subr.bf16.mxu0 0
    %184 = vmatpush1.bf16.msra.mxu0 0
    %185 = vmatprep.subr.bf16.mxu0 0
    %186 = vmatpush1.bf16.msra.mxu0 0
    %187 = vmatprep.subr.bf16.mxu0 0
    %188 = vmatpush1.bf16.msra.mxu0 0
    %189 = vmatprep.subr.bf16.mxu0 0
    %190 = vmatpush1.bf16.msra.mxu0 %v170
    %191 = vmatprep.subr.bf16.mxu0 0
    %192 = vmatpush1.bf16.msra.mxu0 %v169
    %193 = vmatprep.subr.bf16.mxu0 0
    %194 = vmatpush2.bf16.msra.mxu0 0
    %195 = vmatprep.subr.bf16.mxu0 0
    %196 = vmatpush2.bf16.msra.mxu0 0
    %197 = vmatprep.subr.bf16.mxu0 0
    %198 = vmatpush2.bf16.msra.mxu0 0
    %199 = vmatprep.subr.bf16.mxu0 0
    %200 = vmatpush2.bf16.msra.mxu0 0
    %201 = vmatprep.subr.bf16.mxu0 0
    %202 = vmatpush2.bf16.msra.mxu0 0
    %203 = vmatprep.subr.bf16.mxu0 0
    %204 = vmatpush2.bf16.msra.mxu0 0
    %205 = vmatprep.subr.bf16.mxu0 0
    %206 = vmatpush2.bf16.msra.mxu0 0
    %207 = vmatprep.subr.bf16.mxu0 0
    %208 = vmatpush2.bf16.msra.mxu0 0
    %209 = vmatprep.mubr.bf16.mxu0 0
    %210 = vmatmul.mubr.bf16.gmra.mxu0 %v175
    %v211 = vpop.f32.mrf.mxu0
    %v212 = vadd.f32 0.0, %v211
    %v213 = vpop.f32.mrf.mxu0
    %v214 = vpop.f32.mrf.mxu0
    %v215 = vpop.f32.mrf.mxu0
    %216 = vdwg.mxu0
    %v217 = vadd.f32 %v151, %v212
    %v218 = vxor.u32 %v217, 2147483648
    %v219 = vmul.f32 %v218, 1.442695
    %v220 = vpow.pop %v219
    %v221 = vadd.f32 %v220, 1.0
    %v222 = vrcp.pop %v221
    %v223 = vmul.f32 1.0, %v222
    %v224 = vtanh.pop %v217
    %v225 = vmul.f32 %v223, 0.0
    %227 = vrot.lane.b32.xlu0 %v224, 32
    %v228 = vpop.permute.xlu0 %227
    %v230 = vmul.f32 %v223, %v228
    %232 = vrot.lane.b32.xlu0 %v230, 32
    %v233 = vpop.permute.xlu0 %232
    %v235 = vadd.f32 %v225, %v233
    %v236 = vtanh.pop %v235
    %238 = vrot.lane.b32.xlu0 %v236, 32
    %v239 = vpop.permute.xlu0 %238
    %v241 = vmul.f32 %v223, %v239
    %v242 = vpack.c.bf16 %v241, %v241
    %244 = vrot.lane.b32.xlu0 %v242, 64
    %v245 = vpop.permute.xlu0 %244
    %v247 = vsel %vm173, %v245, 0
    %249 = vmatprep.subr.bf16.mxu0 0
    %250 = vmatpush1.bf16.msra.mxu0 0
    %251 = vmatprep.subr.bf16.mxu0 0
    %252 = vmatpush1.bf16.msra.mxu0 0
    %253 = vmatprep.subr.bf16.mxu0 0
    %254 = vmatpush1.bf16.msra.mxu0 0
    %255 = vmatprep.subr.bf16.mxu0 0
    %256 = vmatpush1.bf16.msra.mxu0 0
    %257 = vmatprep.subr.bf16.mxu0 0
    %258 = vmatpush1.bf16.msra.mxu0 0
    %259 = vmatprep.subr.bf16.mxu0 0
    %260 = vmatpush1.bf16.msra.mxu0 0
    %261 = vmatprep.subr.bf16.mxu0 0
    %262 = vmatpush1.bf16.msra.mxu0 %v170
    %263 = vmatprep.subr.bf16.mxu0 0
    %264 = vmatpush1.bf16.msra.mxu0 %v169
    %265 = vmatprep.subr.bf16.mxu0 0
    %266 = vmatpush2.bf16.msra.mxu0 0
    %267 = vmatprep.subr.bf16.mxu0 0
    %268 = vmatpush2.bf16.msra.mxu0 0
    %269 = vmatprep.subr.bf16.mxu0 0
    %270 = vmatpush2.bf16.msra.mxu0 0
    %271 = vmatprep.subr.bf16.mxu0 0
    %272 = vmatpush2.bf16.msra.mxu0 0
    %273 = vmatprep.subr.bf16.mxu0 0
    %274 = vmatpush2.bf16.msra.mxu0 0
    %275 = vmatprep.subr.bf16.mxu0 0
    %276 = vmatpush2.bf16.msra.mxu0 0
    %277 = vmatprep.subr.bf16.mxu0 0
    %278 = vmatpush2.bf16.msra.mxu0 0
    %279 = vmatprep.subr.bf16.mxu0 0
    %280 = vmatpush2.bf16.msra.mxu0 0
    %281 = vmatprep.mubr.bf16.mxu0 0
    %282 = vmatmul.mubr.bf16.gmra.mxu0 %v247
    %v283 = vpop.f32.mrf.mxu0
    %v284 = vadd.f32 0.0, %v283
    %v285 = vpop.f32.mrf.mxu0
    %v286 = vpop.f32.mrf.mxu0
    %v287 = vpop.f32.mrf.mxu0
    %288 = vdwg.mxu0
    %v290 = vrot.slane %v284, 6
    %v292 = vadd.f32 %v151, %v290
    %v293 = vxor.u32 %v292, 2147483648
    %v294 = vmul.f32 %v293, 1.442695
    %v295 = vpow.pop %v294
    %v296 = vadd.f32 %v295, 1.0
    %v297 = vrcp.pop %v296
    %v298 = vmul.f32 1.0, %v297
    %v299 = vtanh.pop %v292
    %v301 = vrot.slane %v235, 6
    %v303 = vmul.f32 %v298, %v301
    %305 = vrot.lane.b32.xlu0 %v299, 32
    %v306 = vpop.permute.xlu0 %305
    %v308 = vmul.f32 %v298, %v306
    %310 = vrot.lane.b32.xlu0 %v308, 32
    %v311 = vpop.permute.xlu0 %310
    %v313 = vadd.f32 %v303, %v311
    %v314 = vtanh.pop %v313
    %316 = vrot.lane.b32.xlu0 %v314, 32
    %v317 = vpop.permute.xlu0 %316
    %v319 = vmul.f32 %v298, %v317
    %v320 = vpack.c.bf16 %v319, %v319
    %v322 = vrot.slane %v320, 1
    %323 = vrot.lane.b32.xlu0 %v322, 64
    %v324 = vpop.permute.xlu0 %323
    %v326 = vsel %vm173, %v324, 0
    %328 = vmatprep.subr.bf16.mxu0 0
    %329 = vmatpush1.bf16.msra.mxu0 0
    %330 = vmatprep.subr.bf16.mxu0 0
    %331 = vmatpush1.bf16.msra.mxu0 0
    %332 = vmatprep.subr.bf16.mxu0 0
    %333 = vmatpush1.bf16.msra.mxu0 0
    %334 = vmatprep.subr.bf16.mxu0 0
    %335 = vmatpush1.bf16.msra.mxu0 0
    %336 = vmatprep.subr.bf16.mxu0 0
    %337 = vmatpush1.bf16.msra.mxu0 0
    %338 = vmatprep.subr.bf16.mxu0 0
    %339 = vmatpush1.bf16.msra.mxu0 0
    %340 = vmatprep.subr.bf16.mxu0 0
    %341 = vmatpush1.bf16.msra.mxu0 %v170
    %342 = vmatprep.subr.bf16.mxu0 0
    %343 = vmatpush1.bf16.msra.mxu0 %v169
    %344 = vmatprep.subr.bf16.mxu0 0
    %345 = vmatpush2.bf16.msra.mxu0 0
    %346 = vmatprep.subr.bf16.mxu0 0
    %347 = vmatpush2.bf16.msra.mxu0 0
    %348 = vmatprep.subr.bf16.mxu0 0
    %349 = vmatpush2.bf16.msra.mxu0 0
    %350 = vmatprep.subr.bf16.mxu0 0
    %351 = vmatpush2.bf16.msra.mxu0 0
    %352 = vmatprep.subr.bf16.mxu0 0
    %353 = vmatpush2.bf16.msra.mxu0 0
    %354 = vmatprep.subr.bf16.mxu0 0
    %355 = vmatpush2.bf16.msra.mxu0 0
    %356 = vmatprep.subr.bf16.mxu0 0
    %357 = vmatpush2.bf16.msra.mxu0 0
    %358 = vmatprep.subr.bf16.mxu0 0
    %359 = vmatpush2.bf16.msra.mxu0 0
    %360 = vmatprep.mubr.bf16.mxu0 0
    %361 = vmatmul.mubr.bf16.gmra.mxu0 %v326
    %v362 = vpop.f32.mrf.mxu0
    %v363 = vadd.f32 0.0, %v362
    %v364 = vpop.f32.mrf.mxu0
    %v365 = vpop.f32.mrf.mxu0
    %v366 = vpop.f32.mrf.mxu0
    %367 = vdwg.mxu0
    %v369 = vrot.slane %v363, 4
    %v371 = vadd.f32 %v151, %v369
    %v372 = vxor.u32 %v371, 2147483648
    %v373 = vmul.f32 %v372, 1.442695
    %v374 = vpow.pop %v373
    %v375 = vadd.f32 %v374, 1.0
    %v376 = vrcp.pop %v375
    %v377 = vmul.f32 1.0, %v376
    %v378 = vtanh.pop %v371
    %v380 = vrot.slane %v313, 6
    %v382 = vmul.f32 %v377, %v380
    %384 = vrot.lane.b32.xlu0 %v378, 32
    %v385 = vpop.permute.xlu0 %384
    %v387 = vmul.f32 %v377, %v385
    %389 = vrot.lane.b32.xlu0 %v387, 32
    %v390 = vpop.permute.xlu0 %389
    %v392 = vadd.f32 %v382, %v390
    %v393 = vtanh.pop %v392
    %395 = vrot.lane.b32.xlu0 %v393, 32
    %v396 = vpop.permute.xlu0 %395
    %v398 = vmul.f32 %v377, %v396
    %v399 = vpack.c.bf16 %v398, %v398
    %v401 = vrot.slane %v399, 2
    %402 = vrot.lane.b32.xlu0 %v401, 64
    %v403 = vpop.permute.xlu0 %402
    %v405 = vsel %vm173, %v403, 0
    %407 = vmatprep.subr.bf16.mxu0 0
    %408 = vmatpush1.bf16.msra.mxu0 0
    %409 = vmatprep.subr.bf16.mxu0 0
    %410 = vmatpush1.bf16.msra.mxu0 0
    %411 = vmatprep.subr.bf16.mxu0 0
    %412 = vmatpush1.bf16.msra.mxu0 0
    %413 = vmatprep.subr.bf16.mxu0 0
    %414 = vmatpush1.bf16.msra.mxu0 0
    %415 = vmatprep.subr.bf16.mxu0 0
    %416 = vmatpush1.bf16.msra.mxu0 0
    %417 = vmatprep.subr.bf16.mxu0 0
    %418 = vmatpush1.bf16.msra.mxu0 0
    %419 = vmatprep.subr.bf16.mxu0 0
    %420 = vmatpush1.bf16.msra.mxu0 %v170
    %421 = vmatprep.subr.bf16.mxu0 0
    %422 = vmatpush1.bf16.msra.mxu0 %v169
    %423 = vmatprep.subr.bf16.mxu0 0
    %424 = vmatpush2.bf16.msra.mxu0 0
    %425 = vmatprep.subr.bf16.mxu0 0
    %426 = vmatpush2.bf16.msra.mxu0 0
    %427 = vmatprep.subr.bf16.mxu0 0
    %428 = vmatpush2.bf16.msra.mxu0 0
    %429 = vmatprep.subr.bf16.mxu0 0
    %430 = vmatpush2.bf16.msra.mxu0 0
    %431 = vmatprep.subr.bf16.mxu0 0
    %432 = vmatpush2.bf16.msra.mxu0 0
    %433 = vmatprep.subr.bf16.mxu0 0
    %434 = vmatpush2.bf16.msra.mxu0 0
    %435 = vmatprep.subr.bf16.mxu0 0
    %436 = vmatpush2.bf16.msra.mxu0 0
    %437 = vmatprep.subr.bf16.mxu0 0
    %438 = vmatpush2.bf16.msra.mxu0 0
    %439 = vmatprep.mubr.bf16.mxu0 0
    %440 = vmatmul.mubr.bf16.gmra.mxu0 %v405
    %v441 = vpop.f32.mrf.mxu0
    %v442 = vadd.f32 0.0, %v441
    %v443 = vpop.f32.mrf.mxu0
    %v444 = vpop.f32.mrf.mxu0
    %v445 = vpop.f32.mrf.mxu0
    %446 = vdwg.mxu0
    %v448 = vrot.slane %v442, 2
    %v450 = vadd.f32 %v151, %v448
    %v451 = vxor.u32 %v450, 2147483648
    %v452 = vmul.f32 %v451, 1.442695
    %v453 = vpow.pop %v452
    %v454 = vadd.f32 %v453, 1.0
    %v455 = vrcp.pop %v454
    %v456 = vmul.f32 1.0, %v455
    %v457 = vtanh.pop %v450
    %v459 = vrot.slane %v392, 6
    %v461 = vmul.f32 %v456, %v459
    %463 = vrot.lane.b32.xlu0 %v457, 32
    %v464 = vpop.permute.xlu0 %463
    %v466 = vmul.f32 %v456, %v464
    %468 = vrot.lane.b32.xlu0 %v466, 32
    %v469 = vpop.permute.xlu0 %468
    %v471 = vadd.f32 %v461, %v469
    %v472 = vtanh.pop %v471
    %474 = vrot.lane.b32.xlu0 %v472, 32
    %v475 = vpop.permute.xlu0 %474
    %v477 = vmul.f32 %v456, %v475
    %v478 = vpack.c.bf16 %v477, %v477
    %v480 = vrot.slane %v478, 3
    %481 = vrot.lane.b32.xlu0 %v480, 64
    %v482 = vpop.permute.xlu0 %481
    %v484 = vsel %vm173, %v482, 0
    %486 = vmatprep.subr.bf16.mxu0 0
    %487 = vmatpush1.bf16.msra.mxu0 0
    %488 = vmatprep.subr.bf16.mxu0 0
    %489 = vmatpush1.bf16.msra.mxu0 0
    %490 = vmatprep.subr.bf16.mxu0 0
    %491 = vmatpush1.bf16.msra.mxu0 0
    %492 = vmatprep.subr.bf16.mxu0 0
    %493 = vmatpush1.bf16.msra.mxu0 0
    %494 = vmatprep.subr.bf16.mxu0 0
    %495 = vmatpush1.bf16.msra.mxu0 0
    %496 = vmatprep.subr.bf16.mxu0 0
    %497 = vmatpush1.bf16.msra.mxu0 0
    %498 = vmatprep.subr.bf16.mxu0 0
    %499 = vmatpush1.bf16.msra.mxu0 %v170
    %500 = vmatprep.subr.bf16.mxu0 0
    %501 = vmatpush1.bf16.msra.mxu0 %v169
    %502 = vmatprep.subr.bf16.mxu0 0
    %503 = vmatpush2.bf16.msra.mxu0 0
    %504 = vmatprep.subr.bf16.mxu0 0
    %505 = vmatpush2.bf16.msra.mxu0 0
    %506 = vmatprep.subr.bf16.mxu0 0
    %507 = vmatpush2.bf16.msra.mxu0 0
    %508 = vmatprep.subr.bf16.mxu0 0
    %509 = vmatpush2.bf16.msra.mxu0 0
    %510 = vmatprep.subr.bf16.mxu0 0
    %511 = vmatpush2.bf16.msra.mxu0 0
    %512 = vmatprep.subr.bf16.mxu0 0
    %513 = vmatpush2.bf16.msra.mxu0 0
    %514 = vmatprep.subr.bf16.mxu0 0
    %515 = vmatpush2.bf16.msra.mxu0 0
    %516 = vmatprep.subr.bf16.mxu0 0
    %517 = vmatpush2.bf16.msra.mxu0 0
    %518 = vmatprep.mubr.bf16.mxu0 0
    %519 = vmatmul.mubr.bf16.gmra.mxu0 %v484
    %v520 = vpop.f32.mrf.mxu0
    %v521 = vadd.f32 0.0, %v520
    %v522 = vpop.f32.mrf.mxu0
    %v523 = vpop.f32.mrf.mxu0
    %v524 = vpop.f32.mrf.mxu0
    %525 = vdwg.mxu0
    %v526 = vadd.f32 %v154, %v521
    %v527 = vxor.u32 %v526, 2147483648
    %v528 = vmul.f32 %v527, 1.442695
    %v529 = vpow.pop %v528
    %v530 = vadd.f32 %v529, 1.0
    %v531 = vrcp.pop %v530
    %v532 = vmul.f32 1.0, %v531
    %v533 = vtanh.pop %v526
    %v535 = vrot.slane %v471, 6
    %v537 = vmul.f32 %v532, %v535
    %539 = vrot.lane.b32.xlu0 %v533, 32
    %v540 = vpop.permute.xlu0 %539
    %v542 = vmul.f32 %v532, %v540
    %544 = vrot.lane.b32.xlu0 %v542, 32
    %v545 = vpop.permute.xlu0 %544
    %v547 = vadd.f32 %v537, %v545
    %v548 = vtanh.pop %v547
    %550 = vrot.lane.b32.xlu0 %v548, 32
    %v551 = vpop.permute.xlu0 %550
    %v553 = vmul.f32 %v532, %v551
    %v554 = vpack.c.bf16 %v553, %v553
    %556 = vrot.lane.b32.xlu0 %v554, 64
    %v557 = vpop.permute.xlu0 %556
    %v559 = vsel %vm173, %v557, 0
    %561 = vmatprep.subr.bf16.mxu0 0
    %562 = vmatpush1.bf16.msra.mxu0 0
    %563 = vmatprep.subr.bf16.mxu0 0
    %564 = vmatpush1.bf16.msra.mxu0 0
    %565 = vmatprep.subr.bf16.mxu0 0
    %566 = vmatpush1.bf16.msra.mxu0 0
    %567 = vmatprep.subr.bf16.mxu0 0
    %568 = vmatpush1.bf16.msra.mxu0 0
    %569 = vmatprep.subr.bf16.mxu0 0
    %570 = vmatpush1.bf16.msra.mxu0 0
    %571 = vmatprep.subr.bf16.mxu0 0
    %572 = vmatpush1.bf16.msra.mxu0 0
    %573 = vmatprep.subr.bf16.mxu0 0
    %574 = vmatpush1.bf16.msra.mxu0 %v170
    %575 = vmatprep.subr.bf16.mxu0 0
    %576 = vmatpush1.bf16.msra.mxu0 %v169
    %577 = vmatprep.subr.bf16.mxu0 0
    %578 = vmatpush2.bf16.msra.mxu0 0
    %579 = vmatprep.subr.bf16.mxu0 0
    %580 = vmatpush2.bf16.msra.mxu0 0
    %581 = vmatprep.subr.bf16.mxu0 0
    %582 = vmatpush2.bf16.msra.mxu0 0
    %583 = vmatprep.subr.bf16.mxu0 0
    %584 = vmatpush2.bf16.msra.mxu0 0
    %585 = vmatprep.subr.bf16.mxu0 0
    %586 = vmatpush2.bf16.msra.mxu0 0
    %587 = vmatprep.subr.bf16.mxu0 0
    %588 = vmatpush2.bf16.msra.mxu0 0
    %589 = vmatprep.subr.bf16.mxu0 0
    %590 = vmatpush2.bf16.msra.mxu0 0
    %591 = vmatprep.subr.bf16.mxu0 0
    %592 = vmatpush2.bf16.msra.mxu0 0
    %593 = vmatprep.mubr.bf16.mxu0 0
    %594 = vmatmul.mubr.bf16.gmra.mxu0 %v559
    %v595 = vpop.f32.mrf.mxu0
    %v596 = vadd.f32 0.0, %v595
    %v597 = vpop.f32.mrf.mxu0
    %v598 = vpop.f32.mrf.mxu0
    %v599 = vpop.f32.mrf.mxu0
    %600 = vdwg.mxu0
    %v602 = vrot.slane %v596, 6
    %v604 = vadd.f32 %v154, %v602
    %v605 = vxor.u32 %v604, 2147483648
    %v606 = vmul.f32 %v605, 1.442695
    %v607 = vpow.pop %v606
    %v608 = vadd.f32 %v607, 1.0
    %v609 = vrcp.pop %v608
    %v610 = vmul.f32 1.0, %v609
    %v611 = vtanh.pop %v604
    %v613 = vrot.slane %v547, 6
    %v615 = vmul.f32 %v610, %v613
    %617 = vrot.lane.b32.xlu0 %v611, 32
    %v618 = vpop.permute.xlu0 %617
    %v620 = vmul.f32 %v610, %v618
    %622 = vrot.lane.b32.xlu0 %v620, 32
    %v623 = vpop.permute.xlu0 %622
    %v625 = vadd.f32 %v615, %v623
    %v626 = vtanh.pop %v625
    %628 = vrot.lane.b32.xlu0 %v626, 32
    %v629 = vpop.permute.xlu0 %628
    %v631 = vmul.f32 %v610, %v629
    %v632 = vpack.c.bf16 %v631, %v631
    %v634 = vrot.slane %v632, 1
    %635 = vrot.lane.b32.xlu0 %v634, 64
    %v636 = vpop.permute.xlu0 %635
    %v638 = vsel %vm173, %v636, 0
    %640 = vmatprep.subr.bf16.mxu0 0
    %641 = vmatpush1.bf16.msra.mxu0 0
    %642 = vmatprep.subr.bf16.mxu0 0
    %643 = vmatpush1.bf16.msra.mxu0 0
    %644 = vmatprep.subr.bf16.mxu0 0
    %645 = vmatpush1.bf16.msra.mxu0 0
    %646 = vmatprep.subr.bf16.mxu0 0
    %647 = vmatpush1.bf16.msra.mxu0 0
    %648 = vmatprep.subr.bf16.mxu0 0
    %649 = vmatpush1.bf16.msra.mxu0 0
    %650 = vmatprep.subr.bf16.mxu0 0
    %651 = vmatpush1.bf16.msra.mxu0 0
    %652 = vmatprep.subr.bf16.mxu0 0
    %653 = vmatpush1.bf16.msra.mxu0 %v170
    %654 = vmatprep.subr.bf16.mxu0 0
    %655 = vmatpush1.bf16.msra.mxu0 %v169
    %656 = vmatprep.subr.bf16.mxu0 0
    %657 = vmatpush2.bf16.msra.mxu0 0
    %658 = vmatprep.subr.bf16.mxu0 0
    %659 = vmatpush2.bf16.msra.mxu0 0
    %660 = vmatprep.subr.bf16.mxu0 0
    %661 = vmatpush2.bf16.msra.mxu0 0
    %662 = vmatprep.subr.bf16.mxu0 0
    %663 = vmatpush2.bf16.msra.mxu0 0
    %664 = vmatprep.subr.bf16.mxu0 0
    %665 = vmatpush2.bf16.msra.mxu0 0
    %666 = vmatprep.subr.bf16.mxu0 0
    %667 = vmatpush2.bf16.msra.mxu0 0
    %668 = vmatprep.subr.bf16.mxu0 0
    %669 = vmatpush2.bf16.msra.mxu0 0
    %670 = vmatprep.subr.bf16.mxu0 0
    %671 = vmatpush2.bf16.msra.mxu0 0
    %672 = vmatprep.mubr.bf16.mxu0 0
    %673 = vmatmul.mubr.bf16.gmra.mxu0 %v638
    %v674 = vpop.f32.mrf.mxu0
    %v675 = vadd.f32 0.0, %v674
    %v676 = vpop.f32.mrf.mxu0
    %v677 = vpop.f32.mrf.mxu0
    %v678 = vpop.f32.mrf.mxu0
    %679 = vdwg.mxu0
    %v681 = vrot.slane %v675, 4
    %v683 = vadd.f32 %v154, %v681
    %v684 = vxor.u32 %v683, 2147483648
    %v685 = vmul.f32 %v684, 1.442695
    %v686 = vpow.pop %v685
    %v687 = vadd.f32 %v686, 1.0
    %v688 = vrcp.pop %v687
    %v689 = vmul.f32 1.0, %v688
    %v690 = vtanh.pop %v683
    %v692 = vrot.slane %v625, 6
    %v694 = vmul.f32 %v689, %v692
    %696 = vrot.lane.b32.xlu0 %v690, 32
    %v697 = vpop.permute.xlu0 %696
    %v699 = vmul.f32 %v689, %v697
    %701 = vrot.lane.b32.xlu0 %v699, 32
    %v702 = vpop.permute.xlu0 %701
    %v704 = vadd.f32 %v694, %v702
    %v705 = vtanh.pop %v704
    %707 = vrot.lane.b32.xlu0 %v705, 32
    %v708 = vpop.permute.xlu0 %707
    %v710 = vmul.f32 %v689, %v708
    %v711 = vpack.c.bf16 %v710, %v710
    %v713 = vrot.slane %v711, 2
    %714 = vrot.lane.b32.xlu0 %v713, 64
    %v715 = vpop.permute.xlu0 %714
    %v717 = vsel %vm173, %v715, 0
    %719 = vmatprep.subr.bf16.mxu0 0
    %720 = vmatpush1.bf16.msra.mxu0 0
    %721 = vmatprep.subr.bf16.mxu0 0
    %722 = vmatpush1.bf16.msra.mxu0 0
    %723 = vmatprep.subr.bf16.mxu0 0
    %724 = vmatpush1.bf16.msra.mxu0 0
    %725 = vmatprep.subr.bf16.mxu0 0
    %726 = vmatpush1.bf16.msra.mxu0 0
    %727 = vmatprep.subr.bf16.mxu0 0
    %728 = vmatpush1.bf16.msra.mxu0 0
    %729 = vmatprep.subr.bf16.mxu0 0
    %730 = vmatpush1.bf16.msra.mxu0 0
    %731 = vmatprep.subr.bf16.mxu0 0
    %732 = vmatpush1.bf16.msra.mxu0 %v170
    %733 = vmatprep.subr.bf16.mxu0 0
    %734 = vmatpush1.bf16.msra.mxu0 %v169
    %735 = vmatprep.subr.bf16.mxu0 0
    %736 = vmatpush2.bf16.msra.mxu0 0
    %737 = vmatprep.subr.bf16.mxu0 0
    %738 = vmatpush2.bf16.msra.mxu0 0
    %739 = vmatprep.subr.bf16.mxu0 0
    %740 = vmatpush2.bf16.msra.mxu0 0
    %741 = vmatprep.subr.bf16.mxu0 0
    %742 = vmatpush2.bf16.msra.mxu0 0
    %743 = vmatprep.subr.bf16.mxu0 0
    %744 = vmatpush2.bf16.msra.mxu0 0
    %745 = vmatprep.subr.bf16.mxu0 0
    %746 = vmatpush2.bf16.msra.mxu0 0
    %747 = vmatprep.subr.bf16.mxu0 0
    %748 = vmatpush2.bf16.msra.mxu0 0
    %749 = vmatprep.subr.bf16.mxu0 0
    %750 = vmatpush2.bf16.msra.mxu0 0
    %751 = vmatprep.mubr.bf16.mxu0 0
    %752 = vmatmul.mubr.bf16.gmra.mxu0 %v717
    %v753 = vpop.f32.mrf.mxu0
    %v754 = vadd.f32 0.0, %v753
    %v755 = vpop.f32.mrf.mxu0
    %v756 = vpop.f32.mrf.mxu0
    %v757 = vpop.f32.mrf.mxu0
    %758 = vdwg.mxu0
    %v760 = vrot.slane %v754, 2
    %v762 = vadd.f32 %v154, %v760
    %v763 = vxor.u32 %v762, 2147483648
    %v764 = vmul.f32 %v763, 1.442695
    %v765 = vpow.pop %v764
    %v766 = vadd.f32 %v765, 1.0
    %v767 = vrcp.pop %v766
    %v768 = vmul.f32 1.0, %v767
    %v769 = vtanh.pop %v762
    %v771 = vrot.slane %v704, 6
    %v773 = vmul.f32 %v768, %v771
    %775 = vrot.lane.b32.xlu0 %v769, 32
    %v776 = vpop.permute.xlu0 %775
    %v778 = vmul.f32 %v768, %v776
    %780 = vrot.lane.b32.xlu0 %v778, 32
    %v781 = vpop.permute.xlu0 %780
    %v783 = vadd.f32 %v773, %v781
    %v784 = vtanh.pop %v783
    %786 = vrot.lane.b32.xlu0 %v784, 32
    %v787 = vpop.permute.xlu0 %786
    %v789 = vmul.f32 %v768, %v787
    %v790 = vld [vmem:[#allocation5] sm:$0xf]
    %v791 = vld [vmem:[#allocation5 + $0x4] sm:$0xf]
    %v792 = vld [vmem:[#allocation5 + $0x8] sm:$0xf]
    %v793 = vld [vmem:[#allocation5 + $0xc] sm:$0xf]
    %v794 = vld [vmem:[#allocation5 + $0x10] sm:$0xf]
    %v795 = vld [vmem:[#allocation5 + $0x14] sm:$0xf]
    %v796 = vld [vmem:[#allocation5 + $0x18] sm:$0xf]
    %v797 = vld [vmem:[#allocation5 + $0x1c] sm:$0xf]
    %s798 = scalar_lea.vmem %s4, 1
    %v799 = vld [vmem:[%s798] sm:$0x1]
    %801 = vrot.lane.b32.xlu0 %v241, 64
    %v802 = vpop.permute.xlu0 %801
    %v804 = vsel %vm173, %v802, 0.0
    %v805 = vpack.c.bf16 %v804, %v804
    %v807 = vlaneseq
    %v808 = vshrl.u32 %v807, 7
    %v809 = vsub.s32 0, %v808
    %v810 = vrot.slane %v799, %v809
    %v820 = vunpack.c.l.b16 %v790
    %v821 = vunpack.c.l.b16 %v791
    %v822 = vunpack.c.l.b16 %v792
    %v823 = vunpack.c.l.b16 %v793
    %v824 = vunpack.c.l.b16 %v794
    %v825 = vunpack.c.l.b16 %v795
    %v826 = vunpack.c.l.b16 %v796
    %v827 = vunpack.c.l.b16 %v797
    %v828 = vpack.c.b16 %v821, %v820
    %v829 = vpack.c.b16 %v823, %v822
    %v830 = vpack.c.b16 %v825, %v824
    %v831 = vpack.c.b16 %v827, %v826
    %v837 = vsel %vm112, %v805, 0
    %839 = vmatprep.subr.bf16.mxu0 0
    %840 = vmatpush1.bf16.msra.mxu0 0
    %841 = vmatprep.subr.bf16.mxu0 0
    %842 = vmatpush1.bf16.msra.mxu0 0
    %843 = vmatprep.subr.bf16.mxu0 0
    %844 = vmatpush1.bf16.msra.mxu0 0
    %845 = vmatprep.subr.bf16.mxu0 0
    %846 = vmatpush1.bf16.msra.mxu0 0
    %847 = vmatprep.subr.bf16.mxu0 0
    %848 = vmatpush1.bf16.msra.mxu0 %v831
    %849 = vmatprep.subr.bf16.mxu0 0
    %850 = vmatpush1.bf16.msra.mxu0 %v830
    %851 = vmatprep.subr.bf16.mxu0 0
    %852 = vmatpush1.bf16.msra.mxu0 %v829
    %853 = vmatprep.subr.bf16.mxu0 0
    %854 = vmatpush1.bf16.msra.mxu0 %v828
    %855 = vmatprep.subr.bf16.mxu0 0
    %856 = vmatpush2.bf16.msra.mxu0 0
    %857 = vmatprep.subr.bf16.mxu0 0
    %858 = vmatpush2.bf16.msra.mxu0 0
    %859 = vmatprep.subr.bf16.mxu0 0
    %860 = vmatpush2.bf16.msra.mxu0 0
    %861 = vmatprep.subr.bf16.mxu0 0
    %862 = vmatpush2.bf16.msra.mxu0 0
    %863 = vmatprep.subr.bf16.mxu0 0
    %864 = vmatpush2.bf16.msra.mxu0 0
    %865 = vmatprep.subr.bf16.mxu0 0
    %866 = vmatpush2.bf16.msra.mxu0 0
    %867 = vmatprep.subr.bf16.mxu0 0
    %868 = vmatpush2.bf16.msra.mxu0 0
    %869 = vmatprep.subr.bf16.mxu0 0
    %870 = vmatpush2.bf16.msra.mxu0 0
    %871 = vmatprep.mubr.bf16.mxu0 0
    %872 = vmatmul.mubr.bf16.gmra.mxu0 %v837
    %v873 = vpop.f32.mrf.mxu0
    %v874 = vadd.f32 %v810, %v873
    %v875 = vpop.f32.mrf.mxu0
    %v876 = vpop.f32.mrf.mxu0
    %v877 = vpop.f32.mrf.mxu0
    %878 = vdwg.mxu0
    %v879 = vxor.u32 %v874, 2147483648
    %v880 = vmul.f32 %v879, 1.442695
    %v881 = vpow.pop %v880
    %v882 = vadd.f32 %v881, 1.0
    %v883 = vrcp.pop %v882
    %v884 = vmul.f32 1.0, %v883
    %v885 = vtanh.pop %v874
    %v886 = vmul.f32 %v884, 0.0
    %888 = vrot.lane.b32.xlu0 %v885, 32
    %v889 = vpop.permute.xlu0 %888
    %v891 = vmul.f32 %v884, %v889
    %893 = vrot.lane.b32.xlu0 %v891, 32
    %v894 = vpop.permute.xlu0 %893
    %v896 = vadd.f32 %v886, %v894
    %v897 = vtanh.pop %v896
    %899 = vrot.lane.b32.xlu0 %v897, 32
    %v900 = vpop.permute.xlu0 %899
    %v902 = vmul.f32 %v884, %v900
    %904 = vrot.lane.b32.xlu0 %v319, 64
    %v905 = vpop.permute.xlu0 %904
    %v908 = vrot.slane %v902, 6
    %909 = vrot.lane.b32.xlu0 %v908, 96
    %v910 = vpop.permute.xlu0 %909
    %v912 = vsel %vm173, %v905, %v910
    %v913 = vpack.c.bf16 %v912, %v912
    %v915 = vrot.slane %v913, 1
    %v917 = vsel %vm112, %v915, 0
    %919 = vmatprep.subr.bf16.mxu0 0
    %920 = vmatpush1.bf16.msra.mxu0 0
    %921 = vmatprep.subr.bf16.mxu0 0
    %922 = vmatpush1.bf16.msra.mxu0 0
    %923 = vmatprep.subr.bf16.mxu0 0
    %924 = vmatpush1.bf16.msra.mxu0 0
    %925 = vmatprep.subr.bf16.mxu0 0
    %926 = vmatpush1.bf16.msra.mxu0 0
    %927 = vmatprep.subr.bf16.mxu0 0
    %928 = vmatpush1.bf16.msra.mxu0 %v831
    %929 = vmatprep.subr.bf16.mxu0 0
    %930 = vmatpush1.bf16.msra.mxu0 %v830
    %931 = vmatprep.subr.bf16.mxu0 0
    %932 = vmatpush1.bf16.msra.mxu0 %v829
    %933 = vmatprep.subr.bf16.mxu0 0
    %934 = vmatpush1.bf16.msra.mxu0 %v828
    %935 = vmatprep.subr.bf16.mxu0 0
    %936 = vmatpush2.bf16.msra.mxu0 0
    %937 = vmatprep.subr.bf16.mxu0 0
    %938 = vmatpush2.bf16.msra.mxu0 0
    %939 = vmatprep.subr.bf16.mxu0 0
    %940 = vmatpush2.bf16.msra.mxu0 0
    %941 = vmatprep.subr.bf16.mxu0 0
    %942 = vmatpush2.bf16.msra.mxu0 0
    %943 = vmatprep.subr.bf16.mxu0 0
    %944 = vmatpush2.bf16.msra.mxu0 0
    %945 = vmatprep.subr.bf16.mxu0 0
    %946 = vmatpush2.bf16.msra.mxu0 0
    %947 = vmatprep.subr.bf16.mxu0 0
    %948 = vmatpush2.bf16.msra.mxu0 0
    %949 = vmatprep.subr.bf16.mxu0 0
    %950 = vmatpush2.bf16.msra.mxu0 0
    %951 = vmatprep.mubr.bf16.mxu0 0
    %952 = vmatmul.mubr.bf16.gmra.mxu0 %v917
    %v953 = vpop.f32.mrf.mxu0
    %v954 = vadd.f32 %v810, %v953
    %v955 = vpop.f32.mrf.mxu0
    %v956 = vpop.f32.mrf.mxu0
    %v957 = vpop.f32.mrf.mxu0
    %958 = vdwg.mxu0
    %v959 = vxor.u32 %v954, 2147483648
    %v960 = vmul.f32 %v959, 1.442695
    %v961 = vpow.pop %v960
    %v962 = vadd.f32 %v961, 1.0
    %v963 = vrcp.pop %v962
    %v964 = vmul.f32 1.0, %v963
    %v965 = vtanh.pop %v954
    %v966 = vmul.f32 %v964, %v896
    %968 = vrot.lane.b32.xlu0 %v965, 32
    %v969 = vpop.permute.xlu0 %968
    %v971 = vmul.f32 %v964, %v969
    %973 = vrot.lane.b32.xlu0 %v971, 32
    %v974 = vpop.permute.xlu0 %973
    %v976 = vadd.f32 %v966, %v974
    %v977 = vtanh.pop %v976
    %979 = vrot.lane.b32.xlu0 %v977, 32
    %v980 = vpop.permute.xlu0 %979
    %v982 = vmul.f32 %v964, %v980
    %984 = vrot.lane.b32.xlu0 %v398, 64
    %v985 = vpop.permute.xlu0 %984
    %v988 = vrot.slane %v982, 4
    %989 = vrot.lane.b32.xlu0 %v988, 96
    %v990 = vpop.permute.xlu0 %989
    %v992 = vsel %vm173, %v985, %v990
    %v993 = vpack.c.bf16 %v992, %v992
    %v995 = vrot.slane %v993, 2
    %v997 = vsel %vm112, %v995, 0
    %999 = vmatprep.subr.bf16.mxu0 0
    %1000 = vmatpush1.bf16.msra.mxu0 0
    %1001 = vmatprep.subr.bf16.mxu0 0
    %1002 = vmatpush1.bf16.msra.mxu0 0
    %1003 = vmatprep.subr.bf16.mxu0 0
    %1004 = vmatpush1.bf16.msra.mxu0 0
    %1005 = vmatprep.subr.bf16.mxu0 0
    %1006 = vmatpush1.bf16.msra.mxu0 0
    %1007 = vmatprep.subr.bf16.mxu0 0
    %1008 = vmatpush1.bf16.msra.mxu0 %v831
    %1009 = vmatprep.subr.bf16.mxu0 0
    %1010 = vmatpush1.bf16.msra.mxu0 %v830
    %1011 = vmatprep.subr.bf16.mxu0 0
    %1012 = vmatpush1.bf16.msra.mxu0 %v829
    %1013 = vmatprep.subr.bf16.mxu0 0
    %1014 = vmatpush1.bf16.msra.mxu0 %v828
    %1015 = vmatprep.subr.bf16.mxu0 0
    %1016 = vmatpush2.bf16.msra.mxu0 0
    %1017 = vmatprep.subr.bf16.mxu0 0
    %1018 = vmatpush2.bf16.msra.mxu0 0
    %1019 = vmatprep.subr.bf16.mxu0 0
    %1020 = vmatpush2.bf16.msra.mxu0 0
    %1021 = vmatprep.subr.bf16.mxu0 0
    %1022 = vmatpush2.bf16.msra.mxu0 0
    %1023 = vmatprep.subr.bf16.mxu0 0
    %1024 = vmatpush2.bf16.msra.mxu0 0
    %1025 = vmatprep.subr.bf16.mxu0 0
    %1026 = vmatpush2.bf16.msra.mxu0 0
    %1027 = vmatprep.subr.bf16.mxu0 0
    %1028 = vmatpush2.bf16.msra.mxu0 0
    %1029 = vmatprep.subr.bf16.mxu0 0
    %1030 = vmatpush2.bf16.msra.mxu0 0
    %1031 = vmatprep.mubr.bf16.mxu0 0
    %1032 = vmatmul.mubr.bf16.gmra.mxu0 %v997
    %v1033 = vpop.f32.mrf.mxu0
    %v1034 = vadd.f32 %v810, %v1033
    %v1035 = vpop.f32.mrf.mxu0
    %v1036 = vpop.f32.mrf.mxu0
    %v1037 = vpop.f32.mrf.mxu0
    %1038 = vdwg.mxu0
    %v1039 = vxor.u32 %v1034, 2147483648
    %v1040 = vmul.f32 %v1039, 1.442695
    %v1041 = vpow.pop %v1040
    %v1042 = vadd.f32 %v1041, 1.0
    %v1043 = vrcp.pop %v1042
    %v1044 = vmul.f32 1.0, %v1043
    %v1045 = vtanh.pop %v1034
    %v1046 = vmul.f32 %v1044, %v976
    %1048 = vrot.lane.b32.xlu0 %v1045, 32
    %v1049 = vpop.permute.xlu0 %1048
    %v1051 = vmul.f32 %v1044, %v1049
    %1053 = vrot.lane.b32.xlu0 %v1051, 32
    %v1054 = vpop.permute.xlu0 %1053
    %v1056 = vadd.f32 %v1046, %v1054
    %v1057 = vtanh.pop %v1056
    %1059 = vrot.lane.b32.xlu0 %v1057, 32
    %v1060 = vpop.permute.xlu0 %1059
    %v1062 = vmul.f32 %v1044, %v1060
    %1064 = vrot.lane.b32.xlu0 %v477, 64
    %v1065 = vpop.permute.xlu0 %1064
    %v1068 = vrot.slane %v1062, 2
    %1069 = vrot.lane.b32.xlu0 %v1068, 96
    %v1070 = vpop.permute.xlu0 %1069
    %v1072 = vsel %vm173, %v1065, %v1070
    %v1073 = vpack.c.bf16 %v1072, %v1072
    %v1075 = vrot.slane %v1073, 3
    %v1077 = vsel %vm112, %v1075, 0
    %1079 = vmatprep.subr.bf16.mxu0 0
    %1080 = vmatpush1.bf16.msra.mxu0 0
    %1081 = vmatprep.subr.bf16.mxu0 0
    %1082 = vmatpush1.bf16.msra.mxu0 0
    %1083 = vmatprep.subr.bf16.mxu0 0
    %1084 = vmatpush1.bf16.msra.mxu0 0
    %1085 = vmatprep.subr.bf16.mxu0 0
    %1086 = vmatpush1.bf16.msra.mxu0 0
    %1087 = vmatprep.subr.bf16.mxu0 0
    %1088 = vmatpush1.bf16.msra.mxu0 %v831
    %1089 = vmatprep.subr.bf16.mxu0 0
    %1090 = vmatpush1.bf16.msra.mxu0 %v830
    %1091 = vmatprep.subr.bf16.mxu0 0
    %1092 = vmatpush1.bf16.msra.mxu0 %v829
    %1093 = vmatprep.subr.bf16.mxu0 0
    %1094 = vmatpush1.bf16.msra.mxu0 %v828
    %1095 = vmatprep.subr.bf16.mxu0 0
    %1096 = vmatpush2.bf16.msra.mxu0 0
    %1097 = vmatprep.subr.bf16.mxu0 0
    %1098 = vmatpush2.bf16.msra.mxu0 0
    %1099 = vmatprep.subr.bf16.mxu0 0
    %1100 = vmatpush2.bf16.msra.mxu0 0
    %1101 = vmatprep.subr.bf16.mxu0 0
    %1102 = vmatpush2.bf16.msra.mxu0 0
    %1103 = vmatprep.subr.bf16.mxu0 0
    %1104 = vmatpush2.bf16.msra.mxu0 0
    %1105 = vmatprep.subr.bf16.mxu0 0
    %1106 = vmatpush2.bf16.msra.mxu0 0
    %1107 = vmatprep.subr.bf16.mxu0 0
    %1108 = vmatpush2.bf16.msra.mxu0 0
    %1109 = vmatprep.subr.bf16.mxu0 0
    %1110 = vmatpush2.bf16.msra.mxu0 0
    %1111 = vmatprep.mubr.bf16.mxu0 0
    %1112 = vmatmul.mubr.bf16.gmra.mxu0 %v1077
    %v1113 = vpop.f32.mrf.mxu0
    %v1114 = vadd.f32 %v810, %v1113
    %v1115 = vpop.f32.mrf.mxu0
    %v1116 = vpop.f32.mrf.mxu0
    %v1117 = vpop.f32.mrf.mxu0
    %1118 = vdwg.mxu0
    %v1119 = vxor.u32 %v1114, 2147483648
    %v1120 = vmul.f32 %v1119, 1.442695
    %v1121 = vpow.pop %v1120
    %v1122 = vadd.f32 %v1121, 1.0
    %v1123 = vrcp.pop %v1122
    %v1124 = vmul.f32 1.0, %v1123
    %v1125 = vtanh.pop %v1114
    %v1126 = vmul.f32 %v1124, %v1056
    %1128 = vrot.lane.b32.xlu0 %v1125, 32
    %v1129 = vpop.permute.xlu0 %1128
    %v1131 = vmul.f32 %v1124, %v1129
    %1133 = vrot.lane.b32.xlu0 %v1131, 32
    %v1134 = vpop.permute.xlu0 %1133
    %v1136 = vadd.f32 %v1126, %v1134
    %v1137 = vtanh.pop %v1136
    %1139 = vrot.lane.b32.xlu0 %v1137, 32
    %v1140 = vpop.permute.xlu0 %1139
    %v1142 = vmul.f32 %v1124, %v1140
    %1144 = vrot.lane.b32.xlu0 %v553, 64
    %v1145 = vpop.permute.xlu0 %1144
    %1148 = vrot.lane.b32.xlu0 %v1142, 96
    %v1149 = vpop.permute.xlu0 %1148
    %v1151 = vsel %vm173, %v1145, %v1149
    %v1152 = vpack.c.bf16 %v1151, %v1151
    %v1154 = vsel %vm112, %v1152, 0
    %1156 = vmatprep.subr.bf16.mxu0 0
    %1157 = vmatpush1.bf16.msra.mxu0 0
    %1158 = vmatprep.subr.bf16.mxu0 0
    %1159 = vmatpush1.bf16.msra.mxu0 0
    %1160 = vmatprep.subr.bf16.mxu0 0
    %1161 = vmatpush1.bf16.msra.mxu0 0
    %1162 = vmatprep.subr.bf16.mxu0 0
    %1163 = vmatpush1.bf16.msra.mxu0 0
    %1164 = vmatprep.subr.bf16.mxu0 0
    %1165 = vmatpush1.bf16.msra.mxu0 %v831
    %1166 = vmatprep.subr.bf16.mxu0 0
    %1167 = vmatpush1.bf16.msra.mxu0 %v830
    %1168 = vmatprep.subr.bf16.mxu0 0
    %1169 = vmatpush1.bf16.msra.mxu0 %v829
    %1170 = vmatprep.subr.bf16.mxu0 0
    %1171 = vmatpush1.bf16.msra.mxu0 %v828
    %1172 = vmatprep.subr.bf16.mxu0 0
    %1173 = vmatpush2.bf16.msra.mxu0 0
    %1174 = vmatprep.subr.bf16.mxu0 0
    %1175 = vmatpush2.bf16.msra.mxu0 0
    %1176 = vmatprep.subr.bf16.mxu0 0
    %1177 = vmatpush2.bf16.msra.mxu0 0
    %1178 = vmatprep.subr.bf16.mxu0 0
    %1179 = vmatpush2.bf16.msra.mxu0 0
    %1180 = vmatprep.subr.bf16.mxu0 0
    %1181 = vmatpush2.bf16.msra.mxu0 0
    %1182 = vmatprep.subr.bf16.mxu0 0
    %1183 = vmatpush2.bf16.msra.mxu0 0
    %1184 = vmatprep.subr.bf16.mxu0 0
    %1185 = vmatpush2.bf16.msra.mxu0 0
    %1186 = vmatprep.subr.bf16.mxu0 0
    %1187 = vmatpush2.bf16.msra.mxu0 0
    %1188 = vmatprep.mubr.bf16.mxu0 0
    %1189 = vmatmul.mubr.bf16.gmra.mxu0 %v1154
    %v1190 = vpop.f32.mrf.mxu0
    %v1191 = vadd.f32 %v810, %v1190
    %v1192 = vpop.f32.mrf.mxu0
    %v1193 = vpop.f32.mrf.mxu0
    %v1194 = vpop.f32.mrf.mxu0
    %1195 = vdwg.mxu0
    %v1196 = vxor.u32 %v1191, 2147483648
    %v1197 = vmul.f32 %v1196, 1.442695
    %v1198 = vpow.pop %v1197
    %v1199 = vadd.f32 %v1198, 1.0
    %v1200 = vrcp.pop %v1199
    %v1201 = vmul.f32 1.0, %v1200
    %v1202 = vtanh.pop %v1191
    %v1203 = vmul.f32 %v1201, %v1136
    %1205 = vrot.lane.b32.xlu0 %v1202, 32
    %v1206 = vpop.permute.xlu0 %1205
    %v1208 = vmul.f32 %v1201, %v1206
    %1210 = vrot.lane.b32.xlu0 %v1208, 32
    %v1211 = vpop.permute.xlu0 %1210
    %v1213 = vadd.f32 %v1203, %v1211
    %v1214 = vtanh.pop %v1213
    %1216 = vrot.lane.b32.xlu0 %v1214, 32
    %v1217 = vpop.permute.xlu0 %1216
    %v1219 = vmul.f32 %v1201, %v1217
    %1221 = vrot.lane.b32.xlu0 %v631, 64
    %v1222 = vpop.permute.xlu0 %1221
    %v1225 = vrot.slane %v1219, 6
    %1226 = vrot.lane.b32.xlu0 %v1225, 96
    %v1227 = vpop.permute.xlu0 %1226
    %v1229 = vsel %vm173, %v1222, %v1227
    %v1230 = vpack.c.bf16 %v1229, %v1229
    %v1232 = vrot.slane %v1230, 1
    %v1234 = vsel %vm112, %v1232, 0
    %1236 = vmatprep.subr.bf16.mxu0 0
    %1237 = vmatpush1.bf16.msra.mxu0 0
    %1238 = vmatprep.subr.bf16.mxu0 0
    %1239 = vmatpush1.bf16.msra.mxu0 0
    %1240 = vmatprep.subr.bf16.mxu0 0
    %1241 = vmatpush1.bf16.msra.mxu0 0
    %1242 = vmatprep.subr.bf16.mxu0 0
    %1243 = vmatpush1.bf16.msra.mxu0 0
    %1244 = vmatprep.subr.bf16.mxu0 0
    %1245 = vmatpush1.bf16.msra.mxu0 %v831
    %1246 = vmatprep.subr.bf16.mxu0 0
    %1247 = vmatpush1.bf16.msra.mxu0 %v830
    %1248 = vmatprep.subr.bf16.mxu0 0
    %1249 = vmatpush1.bf16.msra.mxu0 %v829
    %1250 = vmatprep.subr.bf16.mxu0 0
    %1251 = vmatpush1.bf16.msra.mxu0 %v828
    %1252 = vmatprep.subr.bf16.mxu0 0
    %1253 = vmatpush2.bf16.msra.mxu0 0
    %1254 = vmatprep.subr.bf16.mxu0 0
    %1255 = vmatpush2.bf16.msra.mxu0 0
    %1256 = vmatprep.subr.bf16.mxu0 0
    %1257 = vmatpush2.bf16.msra.mxu0 0
    %1258 = vmatprep.subr.bf16.mxu0 0
    %1259 = vmatpush2.bf16.msra.mxu0 0
    %1260 = vmatprep.subr.bf16.mxu0 0
    %1261 = vmatpush2.bf16.msra.mxu0 0
    %1262 = vmatprep.subr.bf16.mxu0 0
    %1263 = vmatpush2.bf16.msra.mxu0 0
    %1264 = vmatprep.subr.bf16.mxu0 0
    %1265 = vmatpush2.bf16.msra.mxu0 0
    %1266 = vmatprep.subr.bf16.mxu0 0
    %1267 = vmatpush2.bf16.msra.mxu0 0
    %1268 = vmatprep.mubr.bf16.mxu0 0
    %1269 = vmatmul.mubr.bf16.gmra.mxu0 %v1234
    %v1270 = vpop.f32.mrf.mxu0
    %v1271 = vadd.f32 %v810, %v1270
    %v1272 = vpop.f32.mrf.mxu0
    %v1273 = vpop.f32.mrf.mxu0
    %v1274 = vpop.f32.mrf.mxu0
    %1275 = vdwg.mxu0
    %v1276 = vxor.u32 %v1271, 2147483648
    %v1277 = vmul.f32 %v1276, 1.442695
    %v1278 = vpow.pop %v1277
    %v1279 = vadd.f32 %v1278, 1.0
    %v1280 = vrcp.pop %v1279
    %v1281 = vmul.f32 1.0, %v1280
    %v1282 = vtanh.pop %v1271
    %v1283 = vmul.f32 %v1281, %v1213
    %1285 = vrot.lane.b32.xlu0 %v1282, 32
    %v1286 = vpop.permute.xlu0 %1285
    %v1288 = vmul.f32 %v1281, %v1286
    %1290 = vrot.lane.b32.xlu0 %v1288, 32
    %v1291 = vpop.permute.xlu0 %1290
    %v1293 = vadd.f32 %v1283, %v1291
    %v1294 = vtanh.pop %v1293
    %1296 = vrot.lane.b32.xlu0 %v1294, 32
    %v1297 = vpop.permute.xlu0 %1296
    %v1299 = vmul.f32 %v1281, %v1297
    %1301 = vrot.lane.b32.xlu0 %v710, 64
    %v1302 = vpop.permute.xlu0 %1301
    %v1305 = vrot.slane %v1299, 4
    %1306 = vrot.lane.b32.xlu0 %v1305, 96
    %v1307 = vpop.permute.xlu0 %1306
    %v1309 = vsel %vm173, %v1302, %v1307
    %v1310 = vpack.c.bf16 %v1309, %v1309
    %v1312 = vrot.slane %v1310, 2
    %v1314 = vsel %vm112, %v1312, 0
    %1316 = vmatprep.subr.bf16.mxu0 0
    %1317 = vmatpush1.bf16.msra.mxu0 0
    %1318 = vmatprep.subr.bf16.mxu0 0
    %1319 = vmatpush1.bf16.msra.mxu0 0
    %1320 = vmatprep.subr.bf16.mxu0 0
    %1321 = vmatpush1.bf16.msra.mxu0 0
    %1322 = vmatprep.subr.bf16.mxu0 0
    %1323 = vmatpush1.bf16.msra.mxu0 0
    %1324 = vmatprep.subr.bf16.mxu0 0
    %1325 = vmatpush1.bf16.msra.mxu0 %v831
    %1326 = vmatprep.subr.bf16.mxu0 0
    %1327 = vmatpush1.bf16.msra.mxu0 %v830
    %1328 = vmatprep.subr.bf16.mxu0 0
    %1329 = vmatpush1.bf16.msra.mxu0 %v829
    %1330 = vmatprep.subr.bf16.mxu0 0
    %1331 = vmatpush1.bf16.msra.mxu0 %v828
    %1332 = vmatprep.subr.bf16.mxu0 0
    %1333 = vmatpush2.bf16.msra.mxu0 0
    %1334 = vmatprep.subr.bf16.mxu0 0
    %1335 = vmatpush2.bf16.msra.mxu0 0
    %1336 = vmatprep.subr.bf16.mxu0 0
    %1337 = vmatpush2.bf16.msra.mxu0 0
    %1338 = vmatprep.subr.bf16.mxu0 0
    %1339 = vmatpush2.bf16.msra.mxu0 0
    %1340 = vmatprep.subr.bf16.mxu0 0
    %1341 = vmatpush2.bf16.msra.mxu0 0
    %1342 = vmatprep.subr.bf16.mxu0 0
    %1343 = vmatpush2.bf16.msra.mxu0 0
    %1344 = vmatprep.subr.bf16.mxu0 0
    %1345 = vmatpush2.bf16.msra.mxu0 0
    %1346 = vmatprep.subr.bf16.mxu0 0
    %1347 = vmatpush2.bf16.msra.mxu0 0
    %1348 = vmatprep.mubr.bf16.mxu0 0
    %1349 = vmatmul.mubr.bf16.gmra.mxu0 %v1314
    %v1350 = vpop.f32.mrf.mxu0
    %v1351 = vadd.f32 %v810, %v1350
    %v1352 = vpop.f32.mrf.mxu0
    %v1353 = vpop.f32.mrf.mxu0
    %v1354 = vpop.f32.mrf.mxu0
    %1355 = vdwg.mxu0
    %v1356 = vxor.u32 %v1351, 2147483648
    %v1357 = vmul.f32 %v1356, 1.442695
    %v1358 = vpow.pop %v1357
    %v1359 = vadd.f32 %v1358, 1.0
    %v1360 = vrcp.pop %v1359
    %v1361 = vmul.f32 1.0, %v1360
    %v1362 = vtanh.pop %v1351
    %v1363 = vmul.f32 %v1361, %v1293
    %1365 = vrot.lane.b32.xlu0 %v1362, 32
    %v1366 = vpop.permute.xlu0 %1365
    %v1368 = vmul.f32 %v1361, %v1366
    %1370 = vrot.lane.b32.xlu0 %v1368, 32
    %v1371 = vpop.permute.xlu0 %1370
    %v1373 = vadd.f32 %v1363, %v1371
    %v1374 = vtanh.pop %v1373
    %1376 = vrot.lane.b32.xlu0 %v1374, 32
    %v1377 = vpop.permute.xlu0 %1376
    %v1379 = vmul.f32 %v1361, %v1377
    %1381 = vrot.lane.b32.xlu0 %v789, 64
    %v1382 = vpop.permute.xlu0 %1381
    %v1385 = vrot.slane %v1379, 2
    %1386 = vrot.lane.b32.xlu0 %v1385, 96
    %v1387 = vpop.permute.xlu0 %1386
    %v1389 = vsel %vm173, %v1382, %v1387
    %v1390 = vpack.c.bf16 %v1389, %v1389
    %v1392 = vrot.slane %v1390, 3
    %v1394 = vsel %vm112, %v1392, 0
    %1396 = vmatprep.subr.bf16.mxu0 0
    %1397 = vmatpush1.bf16.msra.mxu0 0
    %1398 = vmatprep.subr.bf16.mxu0 0
    %1399 = vmatpush1.bf16.msra.mxu0 0
    %1400 = vmatprep.subr.bf16.mxu0 0
    %1401 = vmatpush1.bf16.msra.mxu0 0
    %1402 = vmatprep.subr.bf16.mxu0 0
    %1403 = vmatpush1.bf16.msra.mxu0 0
    %1404 = vmatprep.subr.bf16.mxu0 0
    %1405 = vmatpush1.bf16.msra.mxu0 %v831
    %1406 = vmatprep.subr.bf16.mxu0 0
    %1407 = vmatpush1.bf16.msra.mxu0 %v830
    %1408 = vmatprep.subr.bf16.mxu0 0
    %1409 = vmatpush1.bf16.msra.mxu0 %v829
    %1410 = vmatprep.subr.bf16.mxu0 0
    %1411 = vmatpush1.bf16.msra.mxu0 %v828
    %1412 = vmatprep.subr.bf16.mxu0 0
    %1413 = vmatpush2.bf16.msra.mxu0 0
    %1414 = vmatprep.subr.bf16.mxu0 0
    %1415 = vmatpush2.bf16.msra.mxu0 0
    %1416 = vmatprep.subr.bf16.mxu0 0
    %1417 = vmatpush2.bf16.msra.mxu0 0
    %1418 = vmatprep.subr.bf16.mxu0 0
    %1419 = vmatpush2.bf16.msra.mxu0 0
    %1420 = vmatprep.subr.bf16.mxu0 0
    %1421 = vmatpush2.bf16.msra.mxu0 0
    %1422 = vmatprep.subr.bf16.mxu0 0
    %1423 = vmatpush2.bf16.msra.mxu0 0
    %1424 = vmatprep.subr.bf16.mxu0 0
    %1425 = vmatpush2.bf16.msra.mxu0 0
    %1426 = vmatprep.subr.bf16.mxu0 0
    %1427 = vmatpush2.bf16.msra.mxu0 0
    %1428 = vmatprep.mubr.bf16.mxu0 0
    %1429 = vmatmul.mubr.bf16.gmra.mxu0 %v1394
    %v1430 = vpop.f32.mrf.mxu0
    %v1431 = vadd.f32 %v810, %v1430
    %v1432 = vpop.f32.mrf.mxu0
    %v1433 = vpop.f32.mrf.mxu0
    %v1434 = vpop.f32.mrf.mxu0
    %1435 = vdwg.mxu0
    %v1436 = vxor.u32 %v1431, 2147483648
    %v1437 = vmul.f32 %v1436, 1.442695
    %v1438 = vpow.pop %v1437
    %v1439 = vadd.f32 %v1438, 1.0
    %v1440 = vrcp.pop %v1439
    %v1441 = vmul.f32 1.0, %v1440
    %v1442 = vtanh.pop %v1431
    %v1443 = vmul.f32 %v1441, %v1373
    %1445 = vrot.lane.b32.xlu0 %v1442, 32
    %v1446 = vpop.permute.xlu0 %1445
    %v1448 = vmul.f32 %v1441, %v1446
    %1450 = vrot.lane.b32.xlu0 %v1448, 32
    %v1451 = vpop.permute.xlu0 %1450
    %v1453 = vadd.f32 %v1443, %v1451
    %v1454 = vtanh.pop %v1453
    %1456 = vrot.lane.b32.xlu0 %v1454, 32
    %v1457 = vpop.permute.xlu0 %1456
    %v1459 = vmul.f32 %v1441, %v1457
    %v1460 = vpack.c.bf16 %v1459, %v1459
    %v1461 = vld [vmem:[%s5] sm:$0xf]
    %v1462 = vld [vmem:[%s5 + $0x4] sm:$0xf]
    %v1463 = vld [vmem:[%s5 + $0x8] sm:$0xf]
    %v1464 = vld [vmem:[%s5 + $0xc] sm:$0xf]
    %v1465 = vld [vmem:[%s6] sm:$0x1]
    %v1467 = vlaneseq
    %v1468 = vshrl.u32 %v1467, 7
    %v1469 = vsub.s32 0, %v1468
    %v1470 = vrot.slane %v1465, %v1469
    %1473 = vrot.lane.b32.xlu0 %v1460, 64
    %v1474 = vpop.permute.xlu0 %1473
    %v1479 = vunpack.c.l.b16 %v1461
    %v1480 = vunpack.c.l.b16 %v1462
    %v1481 = vunpack.c.l.b16 %v1463
    %v1482 = vunpack.c.l.b16 %v1464
    %v1483 = vpack.c.b16 %v1480, %v1479
    %v1484 = vpack.c.b16 %v1482, %v1481
    %v1488 = vsel %vm173, %v1474, 0
    %1490 = vmatprep.subr.bf16.mxu0 0
    %1491 = vmatpush1.bf16.msra.mxu0 0
    %1492 = vmatprep.subr.bf16.mxu0 0
    %1493 = vmatpush1.bf16.msra.mxu0 0
    %1494 = vmatprep.subr.bf16.mxu0 0
    %1495 = vmatpush1.bf16.msra.mxu0 0
    %1496 = vmatprep.subr.bf16.mxu0 0
    %1497 = vmatpush1.bf16.msra.mxu0 0
    %1498 = vmatprep.subr.bf16.mxu0 0
    %1499 = vmatpush1.bf16.msra.mxu0 0
    %1500 = vmatprep.subr.bf16.mxu0 0
    %1501 = vmatpush1.bf16.msra.mxu0 0
    %1502 = vmatprep.subr.bf16.mxu0 0
    %1503 = vmatpush1.bf16.msra.mxu0 %v1484
    %1504 = vmatprep.subr.bf16.mxu0 0
    %1505 = vmatpush1.bf16.msra.mxu0 %v1483
    %1506 = vmatprep.subr.bf16.mxu0 0
    %1507 = vmatpush2.bf16.msra.mxu0 0
    %1508 = vmatprep.subr.bf16.mxu0 0
    %1509 = vmatpush2.bf16.msra.mxu0 0
    %1510 = vmatprep.subr.bf16.mxu0 0
    %1511 = vmatpush2.bf16.msra.mxu0 0
    %1512 = vmatprep.subr.bf16.mxu0 0
    %1513 = vmatpush2.bf16.msra.mxu0 0
    %1514 = vmatprep.subr.bf16.mxu0 0
    %1515 = vmatpush2.bf16.msra.mxu0 0
    %1516 = vmatprep.subr.bf16.mxu0 0
    %1517 = vmatpush2.bf16.msra.mxu0 0
    %1518 = vmatprep.subr.bf16.mxu0 0
    %1519 = vmatpush2.bf16.msra.mxu0 0
    %1520 = vmatprep.subr.bf16.mxu0 0
    %1521 = vmatpush2.bf16.msra.mxu0 0
    %1522 = vmatprep.mubr.bf16.mxu0 0
    %1523 = vmatmul.mubr.bf16.gmra.mxu0 %v1488
    %v1524 = vpop.f32.mrf.mxu0
    %v1525 = vadd.f32 %v1470, %v1524
    %v1526 = vpop.f32.mrf.mxu0
    %v1527 = vpop.f32.mrf.mxu0
    %v1528 = vpop.f32.mrf.mxu0
    %1529 = vdwg.mxu0
    %vm1530 = vcmask 58368
    %v1531 = vsel %vm1530, %v1525, -inf
    %1532 = vmax.xlane.f32.xlu0 %v1531
    %v1533 = vpop.xlane.xlu0 %1532
    %v1534 = vsub.f32 %v1525, %v1533
    %v1535 = vmul.f32 %v1534, 1.442695
    %v1536 = vpow.pop %v1535
    %v1537 = vsel %vm1530, %v1536, 0.0
    %1538 = vadd.xlane.f32.xlu0 %v1537
    %v1539 = vpop.xlane.xlu0 %1538
    %v1540 = vrcp.pop %v1539
    %v1541 = vmul.f32 %v1536, %v1540
    %1542 = vst.msk [vmem:[#allocation7] sm:$0x3] %vm1530, %v1541
    // Predicated region
    $region38: #{tpu_custom_call.1} parent=1 // pred_check
      _
    $region39: #{tpu_custom_call.1} parent=1 // pred_check_branch
      %1544 = sbr.rel (0) target = $region41
    $region40: #{tpu_custom_call.1} parent=1 // pred_region
      %s1546 = ssub.s32 32, 32
      %1547 = vsyncadd [#allocation4], %s1546
      %s1549 = sshll.u32 [#allocation7], 4
      %s1550 = int_to_ptr.vmem [resolvable:$true] %s1549
      %1552 = dma.vmem_to_hbm [thread:$0]  %s1550, 32, %s7, [#allocation4]
    $region41: #{tpu_custom_call.1} parent=1 // pred_fallthru
      _
    // Predicated region
    $region42: #{tpu_custom_call.1} parent=1 // pred_check
      _
    $region43: #{tpu_custom_call.1} parent=1 // pred_check_branch
      %1554 = sbr.rel (0) target = $region45
    $region44: #{tpu_custom_call.1} parent=1 // pred_region
      %1555 = dma.done [#allocation4], 32
    $region45: #{tpu_custom_call.1} parent=1 // pred_fallthru
      _
    %1556 = vsyncpa [#allocation3], 1
    %1557 = vsyncpa [#allocation6], 1
    %1558 = vsyncpa [#allocation4], 1

</llo_original>
